<compile_context>
chip_gen: v5e
topology: v5e:2x2
jax: 0.10.0
libtpu: 0.0.40
codegen_flags: <defaults>
</compile_context>

<pallas_src>
import jax
import jax.numpy as jnp
import numpy as np
from jax import lax
from jax.experimental import pallas as pl
from jax.experimental.pallas import tpu as pltpu

# ----------------------------- config -----------------------------
B = 2            # batch
C = 3            # image channels
IMG = 16         # image size
PS = 4           # patch size
GH = IMG // PS   # patch grid
P = GH * GH      # num patches = 16
S = P + 1        # seq len with CLS = 17
S_PAD = 24       # padded per-image slab rows (multiple of 8; rows S..S_PAD-1 are padding)
D = 32           # hidden size
H = 4            # attention heads
HD = D // H      # head dim = 8
M = 64           # mlp intermediate
NUM_LAYERS = 3
SELECT_LAYER = -2          # args.mm_vision_select_layer
SELECT_FEATURE = "patch"   # args.mm_vision_select_feature
PATCH_DIM = C * PS * PS    # 48
EPS = 1e-5
NEG_INF = -1e30            # safe only while bias/scores stay f32

# hidden_states has NUM_LAYERS+1 entries; only the first L_USED layers are ever needed.
L_USED = (NUM_LAYERS + 1 + SELECT_LAYER) if SELECT_LAYER < 0 else SELECT_LAYER
assert 1 <= L_USED <= NUM_LAYERS
assert SELECT_FEATURE == "patch"   # 'cls_patch' would change the output shape
assert S_PAD % 8 == 0 and S_PAD >= S and P % 8 == 0


def _layernorm(x, g, b):
    mu = jnp.mean(x, axis=-1, keepdims=True)
    var = jnp.mean((x - mu) ** 2, axis=-1, keepdims=True)
    return (x - mu) * lax.rsqrt(var + EPS) * g + b


def _bf(x):
    return x.astype(jnp.bfloat16)


# ------------------------- fused Pallas kernel --------------------------
def fused_tower_kernel(
    patches_ref, wp_ref, cls_ref, pos_ref, preg_ref, preb_ref,
    ln1g_ref, ln1b_ref, wqkv_ref, bqkv_ref, wo_ref, bo_ref,
    ln2g_ref, ln2b_ref, w1_ref, b1_ref, w2_ref, b2_ref,
    out_ref, h_ref,
):
    """Grid = (image, layer). h_ref: (S_PAD, D) f32 residual slab, patches-first layout."""
    l = pl.program_id(1)

    # ---- layer 0 prologue: patch-embed (im2col matmul) + CLS + pos + pre-layernorm ----
    @pl.when(l == 0)
    def _embed():
        g = preg_ref[...]
        bta = preb_ref[...]
        pe = jnp.dot(patches_ref[0], wp_ref[...],
                     preferred_element_type=jnp.float32)               # (P, D)
        # pos is reordered in the wrapper: rows 0..P-1 = patch positions, row P = CLS
        h_ref[0:P, :] = _layernorm(pe + pos_ref[0:P, :], g, bta)       # aligned full block
        h_ref[P:S, :] = _layernorm(cls_ref[...] + pos_ref[P:S, :], g, bta)
        h_ref[S:S_PAD, :] = jnp.zeros((S_PAD - S, D), jnp.float32)     # finite padding rows

    # ---- encoder layer `l` on the per-image (S_PAD, D) slab ----
    x = h_ref[...]                                                      # (S_PAD, D) f32

    # self-attention: fused QKV matmul, true per-head HD-wide lane slices
    y = _layernorm(x, ln1g_ref[0], ln1b_ref[0])
    qkv = jnp.dot(_bf(y), wqkv_ref[0],
                  preferred_element_type=jnp.float32) + bqkv_ref[0]     # (S_PAD, 3D)
    q_bf = _bf(qkv[:, 0:D])            # HD**-0.5 already folded into wq/bq (wrapper)
    k_bf = _bf(qkv[:, D:2 * D])
    v_bf = _bf(qkv[:, 2 * D:3 * D])    # cast once, outside the head loop

    # key-validity bias generated in-kernel: padded key columns (>= S) are masked out;
    # padded query rows still attend to valid keys -> finite softmax, no NaN.
    col = lax.broadcasted_iota(jnp.int32, (S_PAD, S_PAD), 1)
    bias = jnp.where(col < S, jnp.float32(0.0), jnp.float32(NEG_INF))   # (S_PAD, S_PAD)

    heads = []
    for hh in range(H):  # TODO(synk): lax.fori_loop(unroll=k) + 128-padded heads at CLIP-L
        sl = slice(hh * HD, (hh + 1) * HD)                              # 8-aligned stripe
        s = lax.dot_general(q_bf[:, sl], k_bf[:, sl],
                            dimension_numbers=(((1,), (1,)), ((), ())),
                            preferred_element_type=jnp.float32)         # (S_PAD, S_PAD)
        s = s + bias
        s = s - jnp.max(s, axis=-1, keepdims=True)
        p = jnp.exp(s)                 # f32 exp (v5e-safe); bf16 on v6e/v7x at real sizes
        p = p * pl.reciprocal(jnp.sum(p, axis=-1, keepdims=True), approx=True)
        heads.append(jnp.dot(_bf(p), v_bf[:, sl],
                             preferred_element_type=jnp.float32))       # (S_PAD, HD)
    attn = jnp.concatenate(heads, axis=-1)                              # (S_PAD, D)
    attn = jnp.dot(_bf(attn), wo_ref[0],
                   preferred_element_type=jnp.float32) + bo_ref[0]
    x = x + attn

    # MLP (quick_gelu)
    y = _layernorm(x, ln2g_ref[0], ln2b_ref[0])
    h1 = jnp.dot(_bf(y), w1_ref[0], preferred_element_type=jnp.float32) + b1_ref[0]
    h1 = h1 * jax.nn.sigmoid(1.702 * h1)
    h2 = jnp.dot(_bf(h1), w2_ref[0], preferred_element_type=jnp.float32) + b2_ref[0]
    x = x + h2

    h_ref[...] = x

    # ---- last needed layer: patches-first layout -> aligned full-block patch emit ----
    @pl.when(l == L_USED - 1)
    def _emit():
        out_ref[0, :, :] = x[0:P, :]    # CLS (row P) and padding rows dropped in-kernel


# --------------------------- wrapper ------------------------------
def im2col(x):
    # x: (B, C, IMG, IMG) NCHW -> (B, P, C*PS*PS), matching the flattened conv weight
    x = x.reshape(B, C, GH, PS, GH, PS)
    x = x.transpose(0, 2, 4, 1, 3, 5)          # (B, gh, gw, C, ps, ps)
    return x.reshape(B, P, PATCH_DIM)


def clip_vision_tower_forward(images, params):
    """images: (B, C, IMG, IMG) float32 (NCHW, like PyTorch). Returns (B, P, D)."""
    patches = im2col(images)                   # (B, P, PATCH_DIM)

    layers = params["layers"][:L_USED]         # never touch the unused final layer
    stack = lambda name: jnp.stack([lp[name] for lp in layers], axis=0)

    scale = HD ** -0.5                         # fold head-dim scale into wq/bq (one-time)
    wqkv = _bf(jnp.stack(
        [jnp.concatenate([lp["wq"] * scale, lp["wk"], lp["wv"]], axis=1) for lp in layers], 0))
    bqkv = jnp.stack(
        [jnp.concatenate([lp["bq"] * scale, lp["bk"], lp["bv"]], axis=1) for lp in layers], 0)
    ln1g, ln1b = stack("ln1_g"), stack("ln1_b")            # (L, 1, D)
    wo, bo = _bf(stack("wo")), stack("bo")                 # (L, D, D), (L, 1, D)
    ln2g, ln2b = stack("ln2_g"), stack("ln2_b")
    w1, b1 = _bf(stack("w1")), stack("b1")                 # (L, D, M), (L, 1, M)
    w2, b2 = _bf(stack("w2")), stack("b2")                 # (L, M, D), (L, 1, D)

    # patches-first position layout: rows 0..P-1 = patch positions, row P = CLS position
    pos = jnp.concatenate([params["pos"][1:], params["pos"][0:1]], axis=0)   # (S, D)

    full2 = lambda shape: pl.BlockSpec(shape, lambda b, l: (0, 0))
    per_image = lambda shape: pl.BlockSpec((1,) + shape, lambda b, l: (b, 0, 0))
    per_layer = lambda shape: pl.BlockSpec((1,) + shape, lambda b, l: (l, 0, 0))

    return pl.pallas_call(
        fused_tower_kernel,
        out_shape=jax.ShapeDtypeStruct((B, P, D), jnp.float32),
        grid=(B, L_USED),
        in_specs=[
            per_image((P, PATCH_DIM)),           # patches (bf16), one image per grid row
            full2((PATCH_DIM, D)),               # w_patch (bf16)
            full2((1, D)),                       # cls
            full2((S, D)),                       # pos (patches-first order)
            full2((1, D)), full2((1, D)),        # pre-LN gamma / beta
            per_layer((1, D)), per_layer((1, D)),            # ln1
            per_layer((D, 3 * D)), per_layer((1, 3 * D)),    # fused qkv (scale folded)
            per_layer((D, D)), per_layer((1, D)),            # out proj
            per_layer((1, D)), per_layer((1, D)),            # ln2
            per_layer((D, M)), per_layer((1, M)),            # fc1
            per_layer((M, D)), per_layer((1, D)),            # fc2
        ],
        out_specs=pl.BlockSpec((1, P, D), lambda b, l: (b, 0, 0)),
        scratch_shapes=[pltpu.VMEM((S_PAD, D), jnp.float32)],
        # batch axis parallel (megacore on v7x), layer axis sequential (residual carry)
        compiler_params=pltpu.CompilerParams(
            dimension_semantics=("parallel", "arbitrary")),
        # TODO(synk): set vmem_limit_bytes explicitly at CLIP-L sizes (v5e/v6e 128 MiB
        #             physical vs 32 MiB default scoped; v7x 64 MiB physical).
    )(
        _bf(patches), _bf(params["w_patch"]), params["cls"], pos,
        params["pre_g"], params["pre_b"],
        ln1g, ln1b, wqkv, bqkv, wo, bo, ln2g, ln2b, w1, b1, w2, b2,
    )


# ----------------------- deterministic params ----------------------
def init_params(key):
    def nrm(k, shape, scale=0.02):
        return (scale * jax.random.normal(k, shape)).astype(jnp.float32)

    keys = jax.random.split(key, 5 + NUM_LAYERS)
    params = {
        # conv weight (D, C, PS, PS) pre-flattened/transposed -> (PATCH_DIM, D)
        "w_patch": nrm(keys[0], (PATCH_DIM, D)),
        "cls": nrm(keys[1], (1, D)),
        "pos": nrm(keys[2], (S, D)),
        "pre_g": jnp.ones((1, D), jnp.float32),
        "pre_b": jnp.zeros((1, D), jnp.float32),
        "layers": [],
    }
    for l in range(NUM_LAYERS):
        lk = jax.random.split(keys[5 + l], 8)
        params["layers"].append({
            "ln1_g": jnp.ones((1, D), jnp.float32), "ln1_b": jnp.zeros((1, D), jnp.float32),
            # linear weights stored pre-transposed (in, out): y = x @ W + b
            "wq": nrm(lk[0], (D, D)), "bq": jnp.zeros((1, D), jnp.float32),
            "wk": nrm(lk[1], (D, D)), "bk": jnp.zeros((1, D), jnp.float32),
            "wv": nrm(lk[2], (D, D)), "bv": jnp.zeros((1, D), jnp.float32),
            "wo": nrm(lk[3], (D, D)), "bo": jnp.zeros((1, D), jnp.float32),
            "ln2_g": jnp.ones((1, D), jnp.float32), "ln2_b": jnp.zeros((1, D), jnp.float32),
            "w1": nrm(lk[4], (D, M)), "b1": jnp.zeros((1, M), jnp.float32),
            "w2": nrm(lk[5], (M, D)), "b2": jnp.zeros((1, D), jnp.float32),
        })
    return params


# ------------------------- pure-JAX reference (f32) -----------------------
def ref_forward(images, params):
    patches = im2col(images)
    pe = patches @ params["w_patch"]
    cls = jnp.broadcast_to(params["cls"][None], (B, 1, D))
    x = jnp.concatenate([cls, pe], axis=1) + params["pos"][None]
    x = _layernorm(x, params["pre_g"], params["pre_b"])
    hs = [x]
    for lp in params["layers"]:
        r = x
        y = _layernorm(x, lp["ln1_g"], lp["ln1_b"])
        q = ((y @ lp["wq"] + lp["bq"]) * (HD ** -0.5)).reshape(B, S, H, HD).transpose(0, 2, 1, 3)
        k = (y @ lp["wk"] + lp["bk"]).reshape(B, S, H, HD).transpose(0, 2, 1, 3)
        v = (y @ lp["wv"] + lp["bv"]).reshape(B, S, H, HD).transpose(0, 2, 1, 3)
        p = jax.nn.softmax(jnp.einsum("bhqd,bhkd->bhqk", q, k), axis=-1)
        o = jnp.einsum("bhqk,bhkd->bhqd", p, v).transpose(0, 2, 1, 3).reshape(B, S, D)
        x = r + o @ lp["wo"] + lp["bo"]
        r = x
        y = _layernorm(x, lp["ln2_g"], lp["ln2_b"])
        h1 = y @ lp["w1"] + lp["b1"]
        h1 = h1 * jax.nn.sigmoid(1.702 * h1)
        x = r + h1 @ lp["w2"] + lp["b2"]
        hs.append(x)
    return hs[SELECT_LAYER][:, 1:, :]


# ------------------------------ main --------------------------------
if __name__ == "__main__":
    key = jax.random.PRNGKey(0)
    k_img, k_params = jax.random.split(key)
    images = jax.random.normal(k_img, (B, C, IMG, IMG), dtype=jnp.float32)
    params = init_params(k_params)

    forward = jax.jit(clip_vision_tower_forward)
    out = jax.block_until_ready(forward(images, params))
    assert out.shape == (B, P, D), out.shape

    ref = jax.block_until_ready(ref_forward(images, params))
    # kernel uses bf16 matmul operands (f32 accumulation) + approx reciprocal vs f32 ref
    np.testing.assert_allclose(np.asarray(out), np.asarray(ref), atol=2e-2, rtol=2e-2)

    print("KERNEL_OK")
</pallas_src>

<mosaic_0001>
module attributes {stable_mosaic.version = 11 : i64} {
  func.func @fused_tower_kernel(%arg0: i32, %arg1: i32, %arg2: memref<1x16x48xbf16, #tpu.memory_space<vmem>>, %arg3: memref<48x32xbf16, #tpu.memory_space<vmem>>, %arg4: memref<1x32xf32, #tpu.memory_space<vmem>>, %arg5: memref<17x32xf32, #tpu.memory_space<vmem>>, %arg6: memref<1x32xf32, #tpu.memory_space<vmem>>, %arg7: memref<1x32xf32, #tpu.memory_space<vmem>>, %arg8: memref<1x1x32xf32, #tpu.memory_space<vmem>>, %arg9: memref<1x1x32xf32, #tpu.memory_space<vmem>>, %arg10: memref<1x32x96xbf16, #tpu.memory_space<vmem>>, %arg11: memref<1x1x96xf32, #tpu.memory_space<vmem>>, %arg12: memref<1x32x32xbf16, #tpu.memory_space<vmem>>, %arg13: memref<1x1x32xf32, #tpu.memory_space<vmem>>, %arg14: memref<1x1x32xf32, #tpu.memory_space<vmem>>, %arg15: memref<1x1x32xf32, #tpu.memory_space<vmem>>, %arg16: memref<1x32x64xbf16, #tpu.memory_space<vmem>>, %arg17: memref<1x1x64xf32, #tpu.memory_space<vmem>>, %arg18: memref<1x64x32xbf16, #tpu.memory_space<vmem>>, %arg19: memref<1x1x32xf32, #tpu.memory_space<vmem>>, %arg20: memref<1x16x32xf32, #tpu.memory_space<vmem>>, %arg21: memref<24x32xf32, #tpu.memory_space<vmem>>) attributes {dimension_semantics = [#tpu.dimension_semantics<parallel>, #tpu.dimension_semantics<arbitrary>], iteration_bounds = array<i64: 2, 2>, scalar_prefetch = 0 : i64, scratch_operands = 1 : i64, tpu.core_type = #tpu.core_type<tc>, window_params = [{transform_indices = @transform_0, window_bounds = array<i64: 1, 16, 48>}, {pipeline_mode = #tpu.pipeline_mode<synchronous>, transform_indices = @transform_1, window_bounds = array<i64: 48, 32>}, {pipeline_mode = #tpu.pipeline_mode<synchronous>, transform_indices = @transform_2, window_bounds = array<i64: 1, 32>}, {pipeline_mode = #tpu.pipeline_mode<synchronous>, transform_indices = @transform_3, window_bounds = array<i64: 17, 32>}, {pipeline_mode = #tpu.pipeline_mode<synchronous>, transform_indices = @transform_4, window_bounds = array<i64: 1, 32>}, {pipeline_mode = #tpu.pipeline_mode<synchronous>, transform_indices = @transform_5, window_bounds = array<i64: 1, 32>}, {transform_indices = @transform_6, window_bounds = array<i64: 1, 1, 32>}, {transform_indices = @transform_7, window_bounds = array<i64: 1, 1, 32>}, {transform_indices = @transform_8, window_bounds = array<i64: 1, 32, 96>}, {transform_indices = @transform_9, window_bounds = array<i64: 1, 1, 96>}, {transform_indices = @transform_10, window_bounds = array<i64: 1, 32, 32>}, {transform_indices = @transform_11, window_bounds = array<i64: 1, 1, 32>}, {transform_indices = @transform_12, window_bounds = array<i64: 1, 1, 32>}, {transform_indices = @transform_13, window_bounds = array<i64: 1, 1, 32>}, {transform_indices = @transform_14, window_bounds = array<i64: 1, 32, 64>}, {transform_indices = @transform_15, window_bounds = array<i64: 1, 1, 64>}, {transform_indices = @transform_16, window_bounds = array<i64: 1, 64, 32>}, {transform_indices = @transform_17, window_bounds = array<i64: 1, 1, 32>}, {transform_indices = @transform_18, window_bounds = array<i64: 1, 16, 32>}]} {
    %c0_i32 = arith.constant 0 : i32
    %0 = arith.cmpi eq, %arg1, %c0_i32 : i32
    %1 = arith.extui %0 : i1 to i32
    %c0_i32_0 = arith.constant 0 : i32
    %2 = arith.cmpi ne, %1, %c0_i32_0 : i32
    scf.if %2 {
      %c0_74 = arith.constant 0 : index
      %c0_75 = arith.constant 0 : index
      %183 = vector.load %arg6[%c0_74, %c0_75] : memref<1x32xf32, #tpu.memory_space<vmem>>, vector<1x32xf32>
      %c0_76 = arith.constant 0 : index
      %c0_77 = arith.constant 0 : index
      %184 = vector.load %arg7[%c0_76, %c0_77] : memref<1x32xf32, #tpu.memory_space<vmem>>, vector<1x32xf32>
      %c0_78 = arith.constant 0 : index
      %c0_79 = arith.constant 0 : index
      %c0_80 = arith.constant 0 : index
      %185 = vector.load %arg2[%c0_78, %c0_79, %c0_80] : memref<1x16x48xbf16, #tpu.memory_space<vmem>>, vector<1x16x48xbf16>
      %186 = vector.shape_cast %185 : vector<1x16x48xbf16> to vector<16x48xbf16>
      %c0_81 = arith.constant 0 : index
      %c0_82 = arith.constant 0 : index
      %187 = vector.load %arg3[%c0_81, %c0_82] : memref<48x32xbf16, #tpu.memory_space<vmem>>, vector<48x32xbf16>
      %cst_83 = arith.constant dense<0.000000e+00> : vector<16x32xf32>
      %188 = tpu.matmul %186, %187, %cst_83 {dimension_numbers = #tpu.dot_dimension_numbers<[1], [0], [0], [1], [0, 0, 1, 1], [], []>} : vector<16x48xbf16>, vector<48x32xbf16>, vector<16x32xf32> -> vector<16x32xf32>
      %c0_84 = arith.constant 0 : index
      %c0_85 = arith.constant 0 : index
      %189 = vector.load %arg5[%c0_84, %c0_85] : memref<17x32xf32, #tpu.memory_space<vmem>>, vector<16x32xf32>
      %190 = arith.addf %188, %189 : vector<16x32xf32>
      %cst_86 = arith.constant dense<0.000000e+00> : vector<16xf32>
      %191 = vector.multi_reduction <add>, %190, %cst_86 [1] : vector<16x32xf32> to vector<16xf32>
      %192 = vector.shape_cast %191 : vector<16xf32> to vector<16x1xf32>
      %cst_87 = arith.constant 3.200000e+01 : f32
      %193 = vector.broadcast %cst_87 : f32 to vector<16x1xf32>
      %194 = arith.divf %192, %193 : vector<16x1xf32>
      %195 = vector.broadcast %194 : vector<16x1xf32> to vector<16x32xf32>
      %196 = arith.subf %190, %195 : vector<16x32xf32>
      %197 = arith.mulf %196, %196 : vector<16x32xf32>
      %cst_88 = arith.constant dense<0.000000e+00> : vector<16xf32>
      %198 = vector.multi_reduction <add>, %197, %cst_88 [1] : vector<16x32xf32> to vector<16xf32>
      %199 = vector.shape_cast %198 : vector<16xf32> to vector<16x1xf32>
      %cst_89 = arith.constant 3.200000e+01 : f32
      %200 = vector.broadcast %cst_89 : f32 to vector<16x1xf32>
      %201 = arith.divf %199, %200 : vector<16x1xf32>
      %202 = vector.broadcast %194 : vector<16x1xf32> to vector<16x32xf32>
      %203 = arith.subf %190, %202 : vector<16x32xf32>
      %cst_90 = arith.constant 9.99999974E-6 : f32
      %204 = vector.broadcast %cst_90 : f32 to vector<16x1xf32>
      %205 = arith.addf %201, %204 : vector<16x1xf32>
      %206 = math.rsqrt %205 : vector<16x1xf32>
      %207 = vector.broadcast %206 : vector<16x1xf32> to vector<16x32xf32>
      %208 = arith.mulf %203, %207 : vector<16x32xf32>
      %209 = vector.broadcast %183 : vector<1x32xf32> to vector<16x32xf32>
      %210 = arith.mulf %208, %209 : vector<16x32xf32>
      %211 = vector.broadcast %184 : vector<1x32xf32> to vector<16x32xf32>
      %212 = arith.addf %210, %211 : vector<16x32xf32>
      %c0_91 = arith.constant 0 : index
      %c0_92 = arith.constant 0 : index
      %213 = vector.load %arg21[%c0_91, %c0_92] : memref<24x32xf32, #tpu.memory_space<vmem>>, vector<16x32xf32>
      tpu.vector_store %arg21[%c0_91, %c0_92], %212 {strides = array<i32>} : memref<24x32xf32, #tpu.memory_space<vmem>>, vector<16x32xf32>,
      %c0_93 = arith.constant 0 : index
      %c0_94 = arith.constant 0 : index
      %214 = vector.load %arg4[%c0_93, %c0_94] : memref<1x32xf32, #tpu.memory_space<vmem>>, vector<1x32xf32>
      %c16 = arith.constant 16 : index
      %c0_95 = arith.constant 0 : index
      %215 = vector.load %arg5[%c16, %c0_95] : memref<17x32xf32, #tpu.memory_space<vmem>>, vector<1x32xf32>
      %216 = arith.addf %214, %215 : vector<1x32xf32>
      %cst_96 = arith.constant dense<0.000000e+00> : vector<1xf32>
      %217 = vector.multi_reduction <add>, %216, %cst_96 [1] : vector<1x32xf32> to vector<1xf32>
      %218 = vector.shape_cast %217 : vector<1xf32> to vector<1x1xf32>
      %cst_97 = arith.constant 3.200000e+01 : f32
      %219 = vector.broadcast %cst_97 : f32 to vector<1x1xf32>
      %220 = arith.divf %218, %219 : vector<1x1xf32>
      %221 = vector.broadcast %220 : vector<1x1xf32> to vector<1x32xf32>
      %222 = arith.subf %216, %221 : vector<1x32xf32>
      %223 = arith.mulf %222, %222 : vector<1x32xf32>
      %cst_98 = arith.constant dense<0.000000e+00> : vector<1xf32>
      %224 = vector.multi_reduction <add>, %223, %cst_98 [1] : vector<1x32xf32> to vector<1xf32>
      %225 = vector.shape_cast %224 : vector<1xf32> to vector<1x1xf32>
      %cst_99 = arith.constant 3.200000e+01 : f32
      %226 = vector.broadcast %cst_99 : f32 to vector<1x1xf32>
      %227 = arith.divf %225, %226 : vector<1x1xf32>
      %228 = vector.broadcast %220 : vector<1x1xf32> to vector<1x32xf32>
      %229 = arith.subf %216, %228 : vector<1x32xf32>
      %cst_100 = arith.constant 9.99999974E-6 : f32
      %230 = vector.broadcast %cst_100 : f32 to vector<1x1xf32>
      %231 = arith.addf %227, %230 : vector<1x1xf32>
      %232 = math.rsqrt %231 : vector<1x1xf32>
      %233 = vector.broadcast %232 : vector<1x1xf32> to vector<1x32xf32>
      %234 = arith.mulf %229, %233 : vector<1x32xf32>
      %235 = arith.mulf %234, %183 : vector<1x32xf32>
      %236 = arith.addf %235, %184 : vector<1x32xf32>
      %c16_101 = arith.constant 16 : index
      %c0_102 = arith.constant 0 : index
      %237 = vector.load %arg21[%c16_101, %c0_102] : memref<24x32xf32, #tpu.memory_space<vmem>>, vector<1x32xf32>
      tpu.vector_store %arg21[%c16_101, %c0_102], %236 {strides = array<i32>} : memref<24x32xf32, #tpu.memory_space<vmem>>, vector<1x32xf32>,
      %cst_103 = arith.constant 0.000000e+00 : f32
      %238 = vector.broadcast %cst_103 : f32 to vector<7x32xf32>
      %c17 = arith.constant 17 : index
      %c0_104 = arith.constant 0 : index
      %239 = vector.load %arg21[%c17, %c0_104] : memref<24x32xf32, #tpu.memory_space<vmem>>, vector<7x32xf32>
      tpu.vector_store %arg21[%c17, %c0_104], %238 {strides = array<i32>} : memref<24x32xf32, #tpu.memory_space<vmem>>, vector<7x32xf32>,
    } else {
    }
    %c0 = arith.constant 0 : index
    %c0_1 = arith.constant 0 : index
    %3 = vector.load %arg21[%c0, %c0_1] : memref<24x32xf32, #tpu.memory_space<vmem>>, vector<24x32xf32>
    %c0_2 = arith.constant 0 : index
    %c0_3 = arith.constant 0 : index
    %c0_4 = arith.constant 0 : index
    %4 = vector.load %arg8[%c0_2, %c0_3, %c0_4] : memref<1x1x32xf32, #tpu.memory_space<vmem>>, vector<1x1x32xf32>
    %5 = vector.shape_cast %4 : vector<1x1x32xf32> to vector<1x32xf32>
    %c0_5 = arith.constant 0 : index
    %c0_6 = arith.constant 0 : index
    %c0_7 = arith.constant 0 : index
    %6 = vector.load %arg9[%c0_5, %c0_6, %c0_7] : memref<1x1x32xf32, #tpu.memory_space<vmem>>, vector<1x1x32xf32>
    %7 = vector.shape_cast %6 : vector<1x1x32xf32> to vector<1x32xf32>
    %cst = arith.constant dense<0.000000e+00> : vector<24xf32>
    %8 = vector.multi_reduction <add>, %3, %cst [1] : vector<24x32xf32> to vector<24xf32>
    %9 = vector.shape_cast %8 : vector<24xf32> to vector<24x1xf32>
    %cst_8 = arith.constant 3.200000e+01 : f32
    %10 = vector.broadcast %cst_8 : f32 to vector<24x1xf32>
    %11 = arith.divf %9, %10 : vector<24x1xf32>
    %12 = vector.broadcast %11 : vector<24x1xf32> to vector<24x32xf32>
    %13 = arith.subf %3, %12 : vector<24x32xf32>
    %14 = arith.mulf %13, %13 : vector<24x32xf32>
    %cst_9 = arith.constant dense<0.000000e+00> : vector<24xf32>
    %15 = vector.multi_reduction <add>, %14, %cst_9 [1] : vector<24x32xf32> to vector<24xf32>
    %16 = vector.shape_cast %15 : vector<24xf32> to vector<24x1xf32>
    %cst_10 = arith.constant 3.200000e+01 : f32
    %17 = vector.broadcast %cst_10 : f32 to vector<24x1xf32>
    %18 = arith.divf %16, %17 : vector<24x1xf32>
    %19 = vector.broadcast %11 : vector<24x1xf32> to vector<24x32xf32>
    %20 = arith.subf %3, %19 : vector<24x32xf32>
    %cst_11 = arith.constant 9.99999974E-6 : f32
    %21 = vector.broadcast %cst_11 : f32 to vector<24x1xf32>
    %22 = arith.addf %18, %21 : vector<24x1xf32>
    %23 = math.rsqrt %22 : vector<24x1xf32>
    %24 = vector.broadcast %23 : vector<24x1xf32> to vector<24x32xf32>
    %25 = arith.mulf %20, %24 : vector<24x32xf32>
    %26 = vector.broadcast %5 : vector<1x32xf32> to vector<24x32xf32>
    %27 = arith.mulf %25, %26 : vector<24x32xf32>
    %28 = vector.broadcast %7 : vector<1x32xf32> to vector<24x32xf32>
    %29 = arith.addf %27, %28 : vector<24x32xf32>
    %30 = arith.truncf %29 : vector<24x32xf32> to vector<24x32xbf16>
    %c0_12 = arith.constant 0 : index
    %c0_13 = arith.constant 0 : index
    %c0_14 = arith.constant 0 : index
    %31 = vector.load %arg10[%c0_12, %c0_13, %c0_14] : memref<1x32x96xbf16, #tpu.memory_space<vmem>>, vector<1x32x96xbf16>
    %32 = vector.shape_cast %31 : vector<1x32x96xbf16> to vector<32x96xbf16>
    %cst_15 = arith.constant dense<0.000000e+00> : vector<24x96xf32>
    %33 = tpu.matmul %30, %32, %cst_15 {dimension_numbers = #tpu.dot_dimension_numbers<[1], [0], [0], [1], [0, 0, 1, 1], [], []>} : vector<24x32xbf16>, vector<32x96xbf16>, vector<24x96xf32> -> vector<24x96xf32>
    %c0_16 = arith.constant 0 : index
    %c0_17 = arith.constant 0 : index
    %c0_18 = arith.constant 0 : index
    %34 = vector.load %arg11[%c0_16, %c0_17, %c0_18] : memref<1x1x96xf32, #tpu.memory_space<vmem>>, vector<1x1x96xf32>
    %35 = vector.shape_cast %34 : vector<1x1x96xf32> to vector<1x96xf32>
    %36 = vector.broadcast %35 : vector<1x96xf32> to vector<24x96xf32>
    %37 = arith.addf %33, %36 : vector<24x96xf32>
    %38 = vector.extract_strided_slice %37 {offsets = [0, 0], sizes = [24, 32], strides = [1, 1]} : vector<24x96xf32> to vector<24x32xf32>
    %39 = arith.truncf %38 : vector<24x32xf32> to vector<24x32xbf16>
    %40 = vector.extract_strided_slice %37 {offsets = [0, 32], sizes = [24, 32], strides = [1, 1]} : vector<24x96xf32> to vector<24x32xf32>
    %41 = arith.truncf %40 : vector<24x32xf32> to vector<24x32xbf16>
    %42 = vector.extract_strided_slice %37 {offsets = [0, 64], sizes = [24, 32], strides = [1, 1]} : vector<24x96xf32> to vector<24x32xf32>
    %43 = arith.truncf %42 : vector<24x32xf32> to vector<24x32xbf16>
    %44 = tpu.iota {dimensions = array<i32: 1>} : vector<24x24xi32>
    %c17_i32 = arith.constant 17 : i32
    %45 = vector.broadcast %c17_i32 : i32 to vector<24x24xi32>
    %46 = arith.cmpi slt, %44, %45 : vector<24x24xi32>
    %cst_19 = arith.constant 0.000000e+00 : f32
    %cst_20 = arith.constant -1.000000e+30 : f32
    %47 = vector.broadcast %cst_19 : f32 to vector<24x24xf32>
    %48 = vector.broadcast %cst_20 : f32 to vector<24x24xf32>
    %49 = arith.select %46, %47, %48 : vector<24x24xi1>, vector<24x24xf32>
    %50 = vector.extract_strided_slice %39 {offsets = [0, 0], sizes = [24, 8], strides = [1, 1]} : vector<24x32xbf16> to vector<24x8xbf16>
    %51 = vector.extract_strided_slice %41 {offsets = [0, 0], sizes = [24, 8], strides = [1, 1]} : vector<24x32xbf16> to vector<24x8xbf16>
    %cst_21 = arith.constant dense<0.000000e+00> : vector<24x24xf32>
    %52 = tpu.matmul %50, %51, %cst_21 {dimension_numbers = #tpu.dot_dimension_numbers<[1], [1], [0], [0], [0, 0, 1, 0], [], []>} : vector<24x8xbf16>, vector<24x8xbf16>, vector<24x24xf32> -> vector<24x24xf32>
    %53 = arith.addf %52, %49 : vector<24x24xf32>
    %cst_22 = arith.constant dense<0xFF800000> : vector<24xf32>
    %54 = vector.multi_reduction <maximumf>, %53, %cst_22 [1] : vector<24x24xf32> to vector<24xf32>
    %55 = vector.shape_cast %54 : vector<24xf32> to vector<24x1xf32>
    %56 = vector.broadcast %55 : vector<24x1xf32> to vector<24x24xf32>
    %57 = arith.subf %53, %56 : vector<24x24xf32>
    %58 = math.exp %57 : vector<24x24xf32>
    %cst_23 = arith.constant dense<0.000000e+00> : vector<24xf32>
    %59 = vector.multi_reduction <add>, %58, %cst_23 [1] : vector<24x24xf32> to vector<24xf32>
    %60 = vector.shape_cast %59 : vector<24xf32> to vector<24x1xf32>
    %61 = tpu.reciprocal %60 {approx = true} : vector<24x1xf32> -> vector<24x1xf32>
    %62 = vector.broadcast %61 : vector<24x1xf32> to vector<24x24xf32>
    %63 = arith.mulf %58, %62 : vector<24x24xf32>
    %64 = arith.truncf %63 : vector<24x24xf32> to vector<24x24xbf16>
    %65 = vector.extract_strided_slice %43 {offsets = [0, 0], sizes = [24, 8], strides = [1, 1]} : vector<24x32xbf16> to vector<24x8xbf16>
    %cst_24 = arith.constant dense<0.000000e+00> : vector<24x8xf32>
    %66 = tpu.matmul %64, %65, %cst_24 {dimension_numbers = #tpu.dot_dimension_numbers<[1], [0], [0], [1], [0, 0, 1, 1], [], []>} : vector<24x24xbf16>, vector<24x8xbf16>, vector<24x8xf32> -> vector<24x8xf32>
    %67 = vector.extract_strided_slice %39 {offsets = [0, 8], sizes = [24, 8], strides = [1, 1]} : vector<24x32xbf16> to vector<24x8xbf16>
    %68 = vector.extract_strided_slice %41 {offsets = [0, 8], sizes = [24, 8], strides = [1, 1]} : vector<24x32xbf16> to vector<24x8xbf16>
    %cst_25 = arith.constant dense<0.000000e+00> : vector<24x24xf32>
    %69 = tpu.matmul %67, %68, %cst_25 {dimension_numbers = #tpu.dot_dimension_numbers<[1], [1], [0], [0], [0, 0, 1, 0], [], []>} : vector<24x8xbf16>, vector<24x8xbf16>, vector<24x24xf32> -> vector<24x24xf32>
    %70 = arith.addf %69, %49 : vector<24x24xf32>
    %cst_26 = arith.constant dense<0xFF800000> : vector<24xf32>
    %71 = vector.multi_reduction <maximumf>, %70, %cst_26 [1] : vector<24x24xf32> to vector<24xf32>
    %72 = vector.shape_cast %71 : vector<24xf32> to vector<24x1xf32>
    %73 = vector.broadcast %72 : vector<24x1xf32> to vector<24x24xf32>
    %74 = arith.subf %70, %73 : vector<24x24xf32>
    %75 = math.exp %74 : vector<24x24xf32>
    %cst_27 = arith.constant dense<0.000000e+00> : vector<24xf32>
    %76 = vector.multi_reduction <add>, %75, %cst_27 [1] : vector<24x24xf32> to vector<24xf32>
    %77 = vector.shape_cast %76 : vector<24xf32> to vector<24x1xf32>
    %78 = tpu.reciprocal %77 {approx = true} : vector<24x1xf32> -> vector<24x1xf32>
    %79 = vector.broadcast %78 : vector<24x1xf32> to vector<24x24xf32>
    %80 = arith.mulf %75, %79 : vector<24x24xf32>
    %81 = arith.truncf %80 : vector<24x24xf32> to vector<24x24xbf16>
    %82 = vector.extract_strided_slice %43 {offsets = [0, 8], sizes = [24, 8], strides = [1, 1]} : vector<24x32xbf16> to vector<24x8xbf16>
    %cst_28 = arith.constant dense<0.000000e+00> : vector<24x8xf32>
    %83 = tpu.matmul %81, %82, %cst_28 {dimension_numbers = #tpu.dot_dimension_numbers<[1], [0], [0], [1], [0, 0, 1, 1], [], []>} : vector<24x24xbf16>, vector<24x8xbf16>, vector<24x8xf32> -> vector<24x8xf32>
    %84 = vector.extract_strided_slice %39 {offsets = [0, 16], sizes = [24, 8], strides = [1, 1]} : vector<24x32xbf16> to vector<24x8xbf16>
    %85 = vector.extract_strided_slice %41 {offsets = [0, 16], sizes = [24, 8], strides = [1, 1]} : vector<24x32xbf16> to vector<24x8xbf16>
    %cst_29 = arith.constant dense<0.000000e+00> : vector<24x24xf32>
    %86 = tpu.matmul %84, %85, %cst_29 {dimension_numbers = #tpu.dot_dimension_numbers<[1], [1], [0], [0], [0, 0, 1, 0], [], []>} : vector<24x8xbf16>, vector<24x8xbf16>, vector<24x24xf32> -> vector<24x24xf32>
    %87 = arith.addf %86, %49 : vector<24x24xf32>
    %cst_30 = arith.constant dense<0xFF800000> : vector<24xf32>
    %88 = vector.multi_reduction <maximumf>, %87, %cst_30 [1] : vector<24x24xf32> to vector<24xf32>
    %89 = vector.shape_cast %88 : vector<24xf32> to vector<24x1xf32>
    %90 = vector.broadcast %89 : vector<24x1xf32> to vector<24x24xf32>
    %91 = arith.subf %87, %90 : vector<24x24xf32>
    %92 = math.exp %91 : vector<24x24xf32>
    %cst_31 = arith.constant dense<0.000000e+00> : vector<24xf32>
    %93 = vector.multi_reduction <add>, %92, %cst_31 [1] : vector<24x24xf32> to vector<24xf32>
    %94 = vector.shape_cast %93 : vector<24xf32> to vector<24x1xf32>
    %95 = tpu.reciprocal %94 {approx = true} : vector<24x1xf32> -> vector<24x1xf32>
    %96 = vector.broadcast %95 : vector<24x1xf32> to vector<24x24xf32>
    %97 = arith.mulf %92, %96 : vector<24x24xf32>
    %98 = arith.truncf %97 : vector<24x24xf32> to vector<24x24xbf16>
    %99 = vector.extract_strided_slice %43 {offsets = [0, 16], sizes = [24, 8], strides = [1, 1]} : vector<24x32xbf16> to vector<24x8xbf16>
    %cst_32 = arith.constant dense<0.000000e+00> : vector<24x8xf32>
    %100 = tpu.matmul %98, %99, %cst_32 {dimension_numbers = #tpu.dot_dimension_numbers<[1], [0], [0], [1], [0, 0, 1, 1], [], []>} : vector<24x24xbf16>, vector<24x8xbf16>, vector<24x8xf32> -> vector<24x8xf32>
    %101 = vector.extract_strided_slice %39 {offsets = [0, 24], sizes = [24, 8], strides = [1, 1]} : vector<24x32xbf16> to vector<24x8xbf16>
    %102 = vector.extract_strided_slice %41 {offsets = [0, 24], sizes = [24, 8], strides = [1, 1]} : vector<24x32xbf16> to vector<24x8xbf16>
    %cst_33 = arith.constant dense<0.000000e+00> : vector<24x24xf32>
    %103 = tpu.matmul %101, %102, %cst_33 {dimension_numbers = #tpu.dot_dimension_numbers<[1], [1], [0], [0], [0, 0, 1, 0], [], []>} : vector<24x8xbf16>, vector<24x8xbf16>, vector<24x24xf32> -> vector<24x24xf32>
    %104 = arith.addf %103, %49 : vector<24x24xf32>
    %cst_34 = arith.constant dense<0xFF800000> : vector<24xf32>
    %105 = vector.multi_reduction <maximumf>, %104, %cst_34 [1] : vector<24x24xf32> to vector<24xf32>
    %106 = vector.shape_cast %105 : vector<24xf32> to vector<24x1xf32>
    %107 = vector.broadcast %106 : vector<24x1xf32> to vector<24x24xf32>
    %108 = arith.subf %104, %107 : vector<24x24xf32>
    %109 = math.exp %108 : vector<24x24xf32>
    %cst_35 = arith.constant dense<0.000000e+00> : vector<24xf32>
    %110 = vector.multi_reduction <add>, %109, %cst_35 [1] : vector<24x24xf32> to vector<24xf32>
    %111 = vector.shape_cast %110 : vector<24xf32> to vector<24x1xf32>
    %112 = tpu.reciprocal %111 {approx = true} : vector<24x1xf32> -> vector<24x1xf32>
    %113 = vector.broadcast %112 : vector<24x1xf32> to vector<24x24xf32>
    %114 = arith.mulf %109, %113 : vector<24x24xf32>
    %115 = arith.truncf %114 : vector<24x24xf32> to vector<24x24xbf16>
    %116 = vector.extract_strided_slice %43 {offsets = [0, 24], sizes = [24, 8], strides = [1, 1]} : vector<24x32xbf16> to vector<24x8xbf16>
    %cst_36 = arith.constant dense<0.000000e+00> : vector<24x8xf32>
    %117 = tpu.matmul %115, %116, %cst_36 {dimension_numbers = #tpu.dot_dimension_numbers<[1], [0], [0], [1], [0, 0, 1, 1], [], []>} : vector<24x24xbf16>, vector<24x8xbf16>, vector<24x8xf32> -> vector<24x8xf32>
    %118 = tpu.concatenate %66, %83, %100, %117 in 1 : vector<24x8xf32>, vector<24x8xf32>, vector<24x8xf32>, vector<24x8xf32> -> vector<24x32xf32>
    %119 = arith.truncf %118 : vector<24x32xf32> to vector<24x32xbf16>
    %c0_37 = arith.constant 0 : index
    %c0_38 = arith.constant 0 : index
    %c0_39 = arith.constant 0 : index
    %120 = vector.load %arg12[%c0_37, %c0_38, %c0_39] : memref<1x32x32xbf16, #tpu.memory_space<vmem>>, vector<1x32x32xbf16>
    %121 = vector.shape_cast %120 : vector<1x32x32xbf16> to vector<32x32xbf16>
    %cst_40 = arith.constant dense<0.000000e+00> : vector<24x32xf32>
    %122 = tpu.matmul %119, %121, %cst_40 {dimension_numbers = #tpu.dot_dimension_numbers<[1], [0], [0], [1], [0, 0, 1, 1], [], []>} : vector<24x32xbf16>, vector<32x32xbf16>, vector<24x32xf32> -> vector<24x32xf32>
    %c0_41 = arith.constant 0 : index
    %c0_42 = arith.constant 0 : index
    %c0_43 = arith.constant 0 : index
    %123 = vector.load %arg13[%c0_41, %c0_42, %c0_43] : memref<1x1x32xf32, #tpu.memory_space<vmem>>, vector<1x1x32xf32>
    %124 = vector.shape_cast %123 : vector<1x1x32xf32> to vector<1x32xf32>
    %125 = vector.broadcast %124 : vector<1x32xf32> to vector<24x32xf32>
    %126 = arith.addf %122, %125 : vector<24x32xf32>
    %127 = arith.addf %3, %126 : vector<24x32xf32>
    %c0_44 = arith.constant 0 : index
    %c0_45 = arith.constant 0 : index
    %c0_46 = arith.constant 0 : index
    %128 = vector.load %arg14[%c0_44, %c0_45, %c0_46] : memref<1x1x32xf32, #tpu.memory_space<vmem>>, vector<1x1x32xf32>
    %129 = vector.shape_cast %128 : vector<1x1x32xf32> to vector<1x32xf32>
    %c0_47 = arith.constant 0 : index
    %c0_48 = arith.constant 0 : index
    %c0_49 = arith.constant 0 : index
    %130 = vector.load %arg15[%c0_47, %c0_48, %c0_49] : memref<1x1x32xf32, #tpu.memory_space<vmem>>, vector<1x1x32xf32>
    %131 = vector.shape_cast %130 : vector<1x1x32xf32> to vector<1x32xf32>
    %cst_50 = arith.constant dense<0.000000e+00> : vector<24xf32>
    %132 = vector.multi_reduction <add>, %127, %cst_50 [1] : vector<24x32xf32> to vector<24xf32>
    %133 = vector.shape_cast %132 : vector<24xf32> to vector<24x1xf32>
    %cst_51 = arith.constant 3.200000e+01 : f32
    %134 = vector.broadcast %cst_51 : f32 to vector<24x1xf32>
    %135 = arith.divf %133, %134 : vector<24x1xf32>
    %136 = vector.broadcast %135 : vector<24x1xf32> to vector<24x32xf32>
    %137 = arith.subf %127, %136 : vector<24x32xf32>
    %138 = arith.mulf %137, %137 : vector<24x32xf32>
    %cst_52 = arith.constant dense<0.000000e+00> : vector<24xf32>
    %139 = vector.multi_reduction <add>, %138, %cst_52 [1] : vector<24x32xf32> to vector<24xf32>
    %140 = vector.shape_cast %139 : vector<24xf32> to vector<24x1xf32>
    %cst_53 = arith.constant 3.200000e+01 : f32
    %141 = vector.broadcast %cst_53 : f32 to vector<24x1xf32>
    %142 = arith.divf %140, %141 : vector<24x1xf32>
    %143 = vector.broadcast %135 : vector<24x1xf32> to vector<24x32xf32>
    %144 = arith.subf %127, %143 : vector<24x32xf32>
    %cst_54 = arith.constant 9.99999974E-6 : f32
    %145 = vector.broadcast %cst_54 : f32 to vector<24x1xf32>
    %146 = arith.addf %142, %145 : vector<24x1xf32>
    %147 = math.rsqrt %146 : vector<24x1xf32>
    %148 = vector.broadcast %147 : vector<24x1xf32> to vector<24x32xf32>
    %149 = arith.mulf %144, %148 : vector<24x32xf32>
    %150 = vector.broadcast %129 : vector<1x32xf32> to vector<24x32xf32>
    %151 = arith.mulf %149, %150 : vector<24x32xf32>
    %152 = vector.broadcast %131 : vector<1x32xf32> to vector<24x32xf32>
    %153 = arith.addf %151, %152 : vector<24x32xf32>
    %154 = arith.truncf %153 : vector<24x32xf32> to vector<24x32xbf16>
    %c0_55 = arith.constant 0 : index
    %c0_56 = arith.constant 0 : index
    %c0_57 = arith.constant 0 : index
    %155 = vector.load %arg16[%c0_55, %c0_56, %c0_57] : memref<1x32x64xbf16, #tpu.memory_space<vmem>>, vector<1x32x64xbf16>
    %156 = vector.shape_cast %155 : vector<1x32x64xbf16> to vector<32x64xbf16>
    %cst_58 = arith.constant dense<0.000000e+00> : vector<24x64xf32>
    %157 = tpu.matmul %154, %156, %cst_58 {dimension_numbers = #tpu.dot_dimension_numbers<[1], [0], [0], [1], [0, 0, 1, 1], [], []>} : vector<24x32xbf16>, vector<32x64xbf16>, vector<24x64xf32> -> vector<24x64xf32>
    %c0_59 = arith.constant 0 : index
    %c0_60 = arith.constant 0 : index
    %c0_61 = arith.constant 0 : index
    %158 = vector.load %arg17[%c0_59, %c0_60, %c0_61] : memref<1x1x64xf32, #tpu.memory_space<vmem>>, vector<1x1x64xf32>
    %159 = vector.shape_cast %158 : vector<1x1x64xf32> to vector<1x64xf32>
    %160 = vector.broadcast %159 : vector<1x64xf32> to vector<24x64xf32>
    %161 = arith.addf %157, %160 : vector<24x64xf32>
    %cst_62 = arith.constant 1.702000e+00 : f32
    %162 = vector.broadcast %cst_62 : f32 to vector<24x64xf32>
    %163 = arith.mulf %162, %161 : vector<24x64xf32>
    %164 = arith.negf %163 : vector<24x64xf32>
    %165 = math.exp %164 : vector<24x64xf32>
    %cst_63 = arith.constant 1.000000e+00 : f32
    %166 = vector.broadcast %cst_63 : f32 to vector<24x64xf32>
    %167 = arith.addf %166, %165 : vector<24x64xf32>
    %168 = arith.divf %166, %167 : vector<24x64xf32>
    %169 = arith.mulf %161, %168 : vector<24x64xf32>
    %170 = arith.truncf %169 : vector<24x64xf32> to vector<24x64xbf16>
    %c0_64 = arith.constant 0 : index
    %c0_65 = arith.constant 0 : index
    %c0_66 = arith.constant 0 : index
    %171 = vector.load %arg18[%c0_64, %c0_65, %c0_66] : memref<1x64x32xbf16, #tpu.memory_space<vmem>>, vector<1x64x32xbf16>
    %172 = vector.shape_cast %171 : vector<1x64x32xbf16> to vector<64x32xbf16>
    %cst_67 = arith.constant dense<0.000000e+00> : vector<24x32xf32>
    %173 = tpu.matmul %170, %172, %cst_67 {dimension_numbers = #tpu.dot_dimension_numbers<[1], [0], [0], [1], [0, 0, 1, 1], [], []>} : vector<24x64xbf16>, vector<64x32xbf16>, vector<24x32xf32> -> vector<24x32xf32>
    %c0_68 = arith.constant 0 : index
    %c0_69 = arith.constant 0 : index
    %c0_70 = arith.constant 0 : index
    %174 = vector.load %arg19[%c0_68, %c0_69, %c0_70] : memref<1x1x32xf32, #tpu.memory_space<vmem>>, vector<1x1x32xf32>
    %175 = vector.shape_cast %174 : vector<1x1x32xf32> to vector<1x32xf32>
    %176 = vector.broadcast %175 : vector<1x32xf32> to vector<24x32xf32>
    %177 = arith.addf %173, %176 : vector<24x32xf32>
    %178 = arith.addf %127, %177 : vector<24x32xf32>
    %c0_71 = arith.constant 0 : index
    %c0_72 = arith.constant 0 : index
    %179 = vector.load %arg21[%c0_71, %c0_72] : memref<24x32xf32, #tpu.memory_space<vmem>>, vector<24x32xf32>
    tpu.vector_store %arg21[%c0_71, %c0_72], %178 {strides = array<i32>} : memref<24x32xf32, #tpu.memory_space<vmem>>, vector<24x32xf32>,
    %c1_i32 = arith.constant 1 : i32
    %180 = arith.cmpi eq, %arg1, %c1_i32 : i32
    %181 = arith.extui %180 : i1 to i32
    %c0_i32_73 = arith.constant 0 : i32
    %182 = arith.cmpi ne, %181, %c0_i32_73 : i32
    scf.if %182 {
      %183 = vector.extract_strided_slice %178 {offsets = [0, 0], sizes = [16, 32], strides = [1, 1]} : vector<24x32xf32> to vector<16x32xf32>
      %c0_74 = arith.constant 0 : index
      %c0_75 = arith.constant 0 : index
      %c0_76 = arith.constant 0 : index
      %184 = vector.load %arg20[%c0_74, %c0_75, %c0_76] : memref<1x16x32xf32, #tpu.memory_space<vmem>>, vector<1x16x32xf32>
      %185 = vector.shape_cast %184 : vector<1x16x32xf32> to vector<16x32xf32>
      %186 = vector.shape_cast %183 : vector<16x32xf32> to vector<1x16x32xf32>
      tpu.vector_store %arg20[%c0_74, %c0_75, %c0_76], %186 {strides = array<i32>} : memref<1x16x32xf32, #tpu.memory_space<vmem>>, vector<1x16x32xf32>,
    } else {
    }
    return
  }
  func.func @transform_0(%arg0: i32, %arg1: i32) -> (i32, i32, i32) {
    %c0_i32 = arith.constant 0 : i32
    %c0_i32_0 = arith.constant 0 : i32
    %c0_i32_1 = arith.constant 0 : i32
    return %arg0, %c0_i32, %c0_i32_0 : i32, i32, i32
  }
  func.func @transform_1(%arg0: i32, %arg1: i32) -> (i32, i32) {
    %c0_i32 = arith.constant 0 : i32
    %c0_i32_0 = arith.constant 0 : i32
    %c0_i32_1 = arith.constant 0 : i32
    return %c0_i32, %c0_i32_0 : i32, i32
  }
  func.func @transform_2(%arg0: i32, %arg1: i32) -> (i32, i32) {
    %c0_i32 = arith.constant 0 : i32
    %c0_i32_0 = arith.constant 0 : i32
    %c0_i32_1 = arith.constant 0 : i32
    return %c0_i32, %c0_i32_0 : i32, i32
  }
  func.func @transform_3(%arg0: i32, %arg1: i32) -> (i32, i32) {
    %c0_i32 = arith.constant 0 : i32
    %c0_i32_0 = arith.constant 0 : i32
    %c0_i32_1 = arith.constant 0 : i32
    return %c0_i32, %c0_i32_0 : i32, i32
  }
  func.func @transform_4(%arg0: i32, %arg1: i32) -> (i32, i32) {
    %c0_i32 = arith.constant 0 : i32
    %c0_i32_0 = arith.constant 0 : i32
    %c0_i32_1 = arith.constant 0 : i32
    return %c0_i32, %c0_i32_0 : i32, i32
  }
  func.func @transform_5(%arg0: i32, %arg1: i32) -> (i32, i32) {
    %c0_i32 = arith.constant 0 : i32
    %c0_i32_0 = arith.constant 0 : i32
    %c0_i32_1 = arith.constant 0 : i32
    return %c0_i32, %c0_i32_0 : i32, i32
  }
  func.func @transform_6(%arg0: i32, %arg1: i32) -> (i32, i32, i32) {
    %c0_i32 = arith.constant 0 : i32
    %c0_i32_0 = arith.constant 0 : i32
    %c0_i32_1 = arith.constant 0 : i32
    return %arg1, %c0_i32, %c0_i32_0 : i32, i32, i32
  }
  func.func @transform_7(%arg0: i32, %arg1: i32) -> (i32, i32, i32) {
    %c0_i32 = arith.constant 0 : i32
    %c0_i32_0 = arith.constant 0 : i32
    %c0_i32_1 = arith.constant 0 : i32
    return %arg1, %c0_i32, %c0_i32_0 : i32, i32, i32
  }
  func.func @transform_8(%arg0: i32, %arg1: i32) -> (i32, i32, i32) {
    %c0_i32 = arith.constant 0 : i32
    %c0_i32_0 = arith.constant 0 : i32
    %c0_i32_1 = arith.constant 0 : i32
    return %arg1, %c0_i32, %c0_i32_0 : i32, i32, i32
  }
  func.func @transform_9(%arg0: i32, %arg1: i32) -> (i32, i32, i32) {
    %c0_i32 = arith.constant 0 : i32
    %c0_i32_0 = arith.constant 0 : i32
    %c0_i32_1 = arith.constant 0 : i32
    return %arg1, %c0_i32, %c0_i32_0 : i32, i32, i32
  }
  func.func @transform_10(%arg0: i32, %arg1: i32) -> (i32, i32, i32) {
    %c0_i32 = arith.constant 0 : i32
    %c0_i32_0 = arith.constant 0 : i32
    %c0_i32_1 = arith.constant 0 : i32
    return %arg1, %c0_i32, %c0_i32_0 : i32, i32, i32
  }
  func.func @transform_11(%arg0: i32, %arg1: i32) -> (i32, i32, i32) {
    %c0_i32 = arith.constant 0 : i32
    %c0_i32_0 = arith.constant 0 : i32
    %c0_i32_1 = arith.constant 0 : i32
    return %arg1, %c0_i32, %c0_i32_0 : i32, i32, i32
  }
  func.func @transform_12(%arg0: i32, %arg1: i32) -> (i32, i32, i32) {
    %c0_i32 = arith.constant 0 : i32
    %c0_i32_0 = arith.constant 0 : i32
    %c0_i32_1 = arith.constant 0 : i32
    return %arg1, %c0_i32, %c0_i32_0 : i32, i32, i32
  }
  func.func @transform_13(%arg0: i32, %arg1: i32) -> (i32, i32, i32) {
    %c0_i32 = arith.constant 0 : i32
    %c0_i32_0 = arith.constant 0 : i32
    %c0_i32_1 = arith.constant 0 : i32
    return %arg1, %c0_i32, %c0_i32_0 : i32, i32, i32
  }
  func.func @transform_14(%arg0: i32, %arg1: i32) -> (i32, i32, i32) {
    %c0_i32 = arith.constant 0 : i32
    %c0_i32_0 = arith.constant 0 : i32
    %c0_i32_1 = arith.constant 0 : i32
    return %arg1, %c0_i32, %c0_i32_0 : i32, i32, i32
  }
  func.func @transform_15(%arg0: i32, %arg1: i32) -> (i32, i32, i32) {
    %c0_i32 = arith.constant 0 : i32
    %c0_i32_0 = arith.constant 0 : i32
    %c0_i32_1 = arith.constant 0 : i32
    return %arg1, %c0_i32, %c0_i32_0 : i32, i32, i32
  }
  func.func @transform_16(%arg0: i32, %arg1: i32) -> (i32, i32, i32) {
    %c0_i32 = arith.constant 0 : i32
    %c0_i32_0 = arith.constant 0 : i32
    %c0_i32_1 = arith.constant 0 : i32
    return %arg1, %c0_i32, %c0_i32_0 : i32, i32, i32
  }
  func.func @transform_17(%arg0: i32, %arg1: i32) -> (i32, i32, i32) {
    %c0_i32 = arith.constant 0 : i32
    %c0_i32_0 = arith.constant 0 : i32
    %c0_i32_1 = arith.constant 0 : i32
    return %arg1, %c0_i32, %c0_i32_0 : i32, i32, i32
  }
  func.func @transform_18(%arg0: i32, %arg1: i32) -> (i32, i32, i32) {
    %c0_i32 = arith.constant 0 : i32
    %c0_i32_0 = arith.constant 0 : i32
    %c0_i32_1 = arith.constant 0 : i32
    return %arg0, %c0_i32, %c0_i32_0 : i32, i32, i32
  }
}

</mosaic_0001>

<llo_original>
// kernel: clip_vision_tower_forward.1
$region0: #{clip_vision_tower_forward.1}
  #allocation0 [shape = 'u32[]', space=smem, size = 0x4, offset = 0x4, fixed_abs, tag = 'smem constant byte address 0x4 - core index']
  #allocation1 [shape = 'u32[72,128]{1,0:T(1,128)}', space=vmem, size = 0x9000, scoped, tag = 'internal scratch']
  #allocation2 [shape = 'f32[24,32]{1,0:T(8,128)}', space=vmem, size = 0x3000, scoped, tag = 'scratch operand']
  %s0 = inlined_call_operand.vmem [shape: bf16[2,16,48], index: 0, kind: input, shape index: {}]
  %s1 = inlined_call_operand.vmem [shape: bf16[48,32], index: 1, kind: input, shape index: {}]
  %s2 = inlined_call_operand.vmem [shape: f32[1,32], index: 2, kind: input, shape index: {}]
  %s3 = inlined_call_operand.vmem [shape: f32[17,32], index: 3, kind: input, shape index: {}]
  %s4 = inlined_call_operand.vmem [shape: f32[1,32], index: 4, kind: input, shape index: {}]
  %s5 = inlined_call_operand.vmem [shape: f32[1,32], index: 5, kind: input, shape index: {}]
  %s6 = inlined_call_operand.vmem [shape: f32[2,1,32], index: 6, kind: input, shape index: {}]
  %s7 = inlined_call_operand.vmem [shape: f32[2,1,32], index: 7, kind: input, shape index: {}]
  %s8 = inlined_call_operand.vmem [shape: bf16[2,32,96], index: 8, kind: input, shape index: {}]
  %s9 = inlined_call_operand.vmem [shape: f32[2,1,96], index: 9, kind: input, shape index: {}]
  %s10 = inlined_call_operand.vmem [shape: bf16[2,32,32], index: 10, kind: input, shape index: {}]
  %s11 = inlined_call_operand.vmem [shape: f32[2,1,32], index: 11, kind: input, shape index: {}]
  %s12 = inlined_call_operand.vmem [shape: f32[2,1,32], index: 12, kind: input, shape index: {}]
  %s13 = inlined_call_operand.vmem [shape: f32[2,1,32], index: 13, kind: input, shape index: {}]
  %s14 = inlined_call_operand.vmem [shape: bf16[2,32,64], index: 14, kind: input, shape index: {}]
  %s15 = inlined_call_operand.vmem [shape: f32[2,1,64], index: 15, kind: input, shape index: {}]
  %s16 = inlined_call_operand.vmem [shape: bf16[2,64,32], index: 16, kind: input, shape index: {}]
  %s17 = inlined_call_operand.vmem [shape: f32[2,1,32], index: 17, kind: input, shape index: {}]
  %s18 = inlined_call_operand.hbm [shape: f32[2,16,32], index: 18, kind: output, shape index: {}]
  %s19 = sld [smem:[#allocation0]]
  $region113: #{clip_vision_tower_forward.1} parent=0
    _
  %s21 = ssub.s32 1, %s19
  %s22 = scalar_select 0, %s21, %s19
  $region1: #{clip_vision_tower_forward.1} parent=0
    #allocation3 [shape = 'u8[16384]{0}', space=vmem, size = 0x4000, scoped, tag = 'output window, operand 0']
    #allocation4 [shape = 's32[2]{0}', space=sflag, size = 0x8, scoped, tag = 'scoped memory for clip_vision_tower_forward.1']
    %23 = vsyncpa [#allocation4], 0
    %s24 = scalar_lea.sflag [#allocation4], 1
    %25 = vsyncpa %s24, 0
    loop: start=0, step=1, limit=6
    $region2: #{clip_vision_tower_forward.1} parent=1 // loop_pre_header
      _
    $region3: #{clip_vision_tower_forward.1} parent=1 // loop_header
      %s27 = sphi 0, %s31
      %p28 = scmp.ge.s32.totalorder %s27, 6
      %s34 = sphi 0, %s46
      %s35 = sphi 0, %s42
      %s36 = sphi 0, %s34
      %s37 = sphi 0, %s35
      %s38 = sphi 0, %s36
      %s39 = sphi 0, %s37
      %s49 = sphi 0, %s51
      %s52 = sphi 0, %s49
      %s53 = sphi 0, %s52
      %s69 = sphi 0, %s53
      %s73 = sphi 0, %s73
      %s75 = sphi 0, %s73
      %s76 = sphi 0, %s75
      %s90 = sphi 0, %s76
      %s94 = sphi 0, %s94
      %s96 = sphi 0, %s94
      %s97 = sphi 0, %s96
      %s111 = sphi 0, %s97
      %s115 = sphi 0, %s115
      %s117 = sphi 0, %s115
      %s118 = sphi 0, %s117
      %s132 = sphi 0, %s118
      %s136 = sphi 0, %s136
      %s138 = sphi 0, %s136
      %s139 = sphi 0, %s138
      %s153 = sphi 0, %s139
      %s157 = sphi 0, %s157
      %s159 = sphi 0, %s157
      %s160 = sphi 0, %s159
      %s174 = sphi 0, %s160
      %s180 = sphi 0, %s182
      %s183 = sphi 0, %s180
      %s184 = sphi 0, %s183
      %s200 = sphi 0, %s184
      %s206 = sphi 0, %s208
      %s209 = sphi 0, %s206
      %s210 = sphi 0, %s209
      %s226 = sphi 0, %s210
      %s232 = sphi 0, %s234
      %s235 = sphi 0, %s232
      %s236 = sphi 0, %s235
      %s252 = sphi 0, %s236
      %s258 = sphi 0, %s260
      %s261 = sphi 0, %s258
      %s262 = sphi 0, %s261
      %s278 = sphi 0, %s262
      %s284 = sphi 0, %s286
      %s287 = sphi 0, %s284
      %s288 = sphi 0, %s287
      %s304 = sphi 0, %s288
      %s310 = sphi 0, %s312
      %s313 = sphi 0, %s310
      %s314 = sphi 0, %s313
      %s330 = sphi 0, %s314
      %s336 = sphi 0, %s338
      %s339 = sphi 0, %s336
      %s340 = sphi 0, %s339
      %s356 = sphi 0, %s340
      %s362 = sphi 0, %s364
      %s365 = sphi 0, %s362
      %s366 = sphi 0, %s365
      %s382 = sphi 0, %s366
      %s388 = sphi 0, %s390
      %s391 = sphi 0, %s388
      %s392 = sphi 0, %s391
      %s408 = sphi 0, %s392
      %s414 = sphi 0, %s416
      %s417 = sphi 0, %s414
      %s418 = sphi 0, %s417
      %s434 = sphi 0, %s418
      %s440 = sphi 0, %s442
      %s443 = sphi 0, %s440
      %s444 = sphi 0, %s443
      %s460 = sphi 0, %s444
      %s466 = sphi 0, %s468
      %s469 = sphi 0, %s466
      %s470 = sphi 0, %s469
      %s486 = sphi 0, %s470
      %s492 = sphi 0, %s494
      %s495 = sphi 0, %s492
      %s496 = sphi 0, %s495
      %s512 = sphi 0, %s496
    $region4: #{clip_vision_tower_forward.1} parent=1 // loop_header_branch
      %30 = sbr.rel (%p28) target = $region8
    $region5: #{clip_vision_tower_forward.1} parent=1 // loop_body
      %s32 = ssub.s32 %s27, 1
      %s33 = ssub.s32 %s27, 2
      %s40 = sadd.s32 1, %s35
      %p41 = scmp.ge.s32.totalorder %s40, 2
      %s42 = scalar_select %p41, 0, %s40
      %s43 = sadd.s32 1, %s34
      %s44 = scalar_select %p41, %s43, %s34
      %p45 = scmp.ge.s32.totalorder %s44, 2
      %s46 = scalar_select %p45, 0, %s44
      %s47 = ssub.s32 %s34, %s46
      %p48 = scmp.eq.s32.totalorder %s47, 0
      %s50 = sadd.s32 %s49, 1
      %s51 = scalar_select %p48, %s49, %s50
      %p54 = pneg %p48
      %p55 = scmp.eq.s32.totalorder %s27, 3
      %p56 = por %p54, %p55
      %p57 = scmp.ne.s32.totalorder %s49, %s52
      %p58 = scmp.eq.s32.totalorder %s27, 0
      %p59 = por %p57, %p58
      %p60 = scmp.ne.s32.totalorder %s49, %s52
      %p61 = scmp.eq.s32.totalorder %s32, 3
      %p62 = por %p60, %p61
      %p63 = scmp.ne.s32.totalorder %s52, %s53
      %p64 = scmp.eq.s32.totalorder %s32, 0
      %p65 = por %p63, %p64
      %p66 = scmp.ne.s32.totalorder %s52, %s53
      %p67 = scmp.eq.s32.totalorder %s33, 3
      %p68 = por %p66, %p67
      %p70 = scmp.ne.s32.totalorder %s53, %s69
      %p71 = scmp.eq.s32.totalorder %s33, 0
      %p72 = por %p70, %p71
      %s74 = sadd.s32 %s73, 1
      %p77 = scmp.eq.s32.totalorder %s27, 3
      %p78 = scmp.ne.s32.totalorder %s73, %s75
      %p79 = scmp.eq.s32.totalorder %s27, 0
      %p80 = por %p78, %p79
      %p81 = scmp.ne.s32.totalorder %s73, %s75
      %p82 = scmp.eq.s32.totalorder %s32, 3
      %p83 = por %p81, %p82
      %p84 = scmp.ne.s32.totalorder %s75, %s76
      %p85 = scmp.eq.s32.totalorder %s32, 0
      %p86 = por %p84, %p85
      %p87 = scmp.ne.s32.totalorder %s75, %s76
      %p88 = scmp.eq.s32.totalorder %s33, 3
      %p89 = por %p87, %p88
      %p91 = scmp.ne.s32.totalorder %s76, %s90
      %p92 = scmp.eq.s32.totalorder %s33, 0
      %p93 = por %p91, %p92
      %s95 = sadd.s32 %s94, 1
      %p98 = scmp.eq.s32.totalorder %s27, 3
      %p99 = scmp.ne.s32.totalorder %s94, %s96
      %p100 = scmp.eq.s32.totalorder %s27, 0
      %p101 = por %p99, %p100
      %p102 = scmp.ne.s32.totalorder %s94, %s96
      %p103 = scmp.eq.s32.totalorder %s32, 3
      %p104 = por %p102, %p103
      %p105 = scmp.ne.s32.totalorder %s96, %s97
      %p106 = scmp.eq.s32.totalorder %s32, 0
      %p107 = por %p105, %p106
      %p108 = scmp.ne.s32.totalorder %s96, %s97
      %p109 = scmp.eq.s32.totalorder %s33, 3
      %p110 = por %p108, %p109
      %p112 = scmp.ne.s32.totalorder %s97, %s111
      %p113 = scmp.eq.s32.totalorder %s33, 0
      %p114 = por %p112, %p113
      %s116 = sadd.s32 %s115, 1
      %p119 = scmp.eq.s32.totalorder %s27, 3
      %p120 = scmp.ne.s32.totalorder %s115, %s117
      %p121 = scmp.eq.s32.totalorder %s27, 0
      %p122 = por %p120, %p121
      %p123 = scmp.ne.s32.totalorder %s115, %s117
      %p124 = scmp.eq.s32.totalorder %s32, 3
      %p125 = por %p123, %p124
      %p126 = scmp.ne.s32.totalorder %s117, %s118
      %p127 = scmp.eq.s32.totalorder %s32, 0
      %p128 = por %p126, %p127
      %p129 = scmp.ne.s32.totalorder %s117, %s118
      %p130 = scmp.eq.s32.totalorder %s33, 3
      %p131 = por %p129, %p130
      %p133 = scmp.ne.s32.totalorder %s118, %s132
      %p134 = scmp.eq.s32.totalorder %s33, 0
      %p135 = por %p133, %p134
      %s137 = sadd.s32 %s136, 1
      %p140 = scmp.eq.s32.totalorder %s27, 3
      %p141 = scmp.ne.s32.totalorder %s136, %s138
      %p142 = scmp.eq.s32.totalorder %s27, 0
      %p143 = por %p141, %p142
      %p144 = scmp.ne.s32.totalorder %s136, %s138
      %p145 = scmp.eq.s32.totalorder %s32, 3
      %p146 = por %p144, %p145
      %p147 = scmp.ne.s32.totalorder %s138, %s139
      %p148 = scmp.eq.s32.totalorder %s32, 0
      %p149 = por %p147, %p148
      %p150 = scmp.ne.s32.totalorder %s138, %s139
      %p151 = scmp.eq.s32.totalorder %s33, 3
      %p152 = por %p150, %p151
      %p154 = scmp.ne.s32.totalorder %s139, %s153
      %p155 = scmp.eq.s32.totalorder %s33, 0
      %p156 = por %p154, %p155
      %s158 = sadd.s32 %s157, 1
      %p161 = scmp.eq.s32.totalorder %s27, 3
      %p162 = scmp.ne.s32.totalorder %s157, %s159
      %p163 = scmp.eq.s32.totalorder %s27, 0
      %p164 = por %p162, %p163
      %p165 = scmp.ne.s32.totalorder %s157, %s159
      %p166 = scmp.eq.s32.totalorder %s32, 3
      %p167 = por %p165, %p166
      %p168 = scmp.ne.s32.totalorder %s159, %s160
      %p169 = scmp.eq.s32.totalorder %s32, 0
      %p170 = por %p168, %p169
      %p171 = scmp.ne.s32.totalorder %s159, %s160
      %p172 = scmp.eq.s32.totalorder %s33, 3
      %p173 = por %p171, %p172
      %p175 = scmp.ne.s32.totalorder %s160, %s174
      %p176 = scmp.eq.s32.totalorder %s33, 0
      %p177 = por %p175, %p176
      %s178 = ssub.s32 %s35, %s42
      %p179 = scmp.eq.s32.totalorder %s178, 0
      %s181 = sadd.s32 %s180, 1
      %s182 = scalar_select %p179, %s180, %s181
      %p185 = pneg %p179
      %p186 = scmp.eq.s32.totalorder %s27, 3
      %p187 = por %p185, %p186
      %p188 = scmp.ne.s32.totalorder %s180, %s183
      %p189 = scmp.eq.s32.totalorder %s27, 0
      %p190 = por %p188, %p189
      %p191 = scmp.ne.s32.totalorder %s180, %s183
      %p192 = scmp.eq.s32.totalorder %s32, 3
      %p193 = por %p191, %p192
      %p194 = scmp.ne.s32.totalorder %s183, %s184
      %p195 = scmp.eq.s32.totalorder %s32, 0
      %p196 = por %p194, %p195
      %p197 = scmp.ne.s32.totalorder %s183, %s184
      %p198 = scmp.eq.s32.totalorder %s33, 3
      %p199 = por %p197, %p198
      %p201 = scmp.ne.s32.totalorder %s184, %s200
      %p202 = scmp.eq.s32.totalorder %s33, 0
      %p203 = por %p201, %p202
      %s204 = ssub.s32 %s35, %s42
      %p205 = scmp.eq.s32.totalorder %s204, 0
      %s207 = sadd.s32 %s206, 1
      %s208 = scalar_select %p205, %s206, %s207
      %p211 = pneg %p205
      %p212 = scmp.eq.s32.totalorder %s27, 3
      %p213 = por %p211, %p212
      %p214 = scmp.ne.s32.totalorder %s206, %s209
      %p215 = scmp.eq.s32.totalorder %s27, 0
      %p216 = por %p214, %p215
      %p217 = scmp.ne.s32.totalorder %s206, %s209
      %p218 = scmp.eq.s32.totalorder %s32, 3
      %p219 = por %p217, %p218
      %p220 = scmp.ne.s32.totalorder %s209, %s210
      %p221 = scmp.eq.s32.totalorder %s32, 0
      %p222 = por %p220, %p221
      %p223 = scmp.ne.s32.totalorder %s209, %s210
      %p224 = scmp.eq.s32.totalorder %s33, 3
      %p225 = por %p223, %p224
      %p227 = scmp.ne.s32.totalorder %s210, %s226
      %p228 = scmp.eq.s32.totalorder %s33, 0
      %p229 = por %p227, %p228
      %s230 = ssub.s32 %s35, %s42
      %p231 = scmp.eq.s32.totalorder %s230, 0
      %s233 = sadd.s32 %s232, 1
      %s234 = scalar_select %p231, %s232, %s233
      %p237 = pneg %p231
      %p238 = scmp.eq.s32.totalorder %s27, 3
      %p239 = por %p237, %p238
      %p240 = scmp.ne.s32.totalorder %s232, %s235
      %p241 = scmp.eq.s32.totalorder %s27, 0
      %p242 = por %p240, %p241
      %p243 = scmp.ne.s32.totalorder %s232, %s235
      %p244 = scmp.eq.s32.totalorder %s32, 3
      %p245 = por %p243, %p244
      %p246 = scmp.ne.s32.totalorder %s235, %s236
      %p247 = scmp.eq.s32.totalorder %s32, 0
      %p248 = por %p246, %p247
      %p249 = scmp.ne.s32.totalorder %s235, %s236
      %p250 = scmp.eq.s32.totalorder %s33, 3
      %p251 = por %p249, %p250
      %p253 = scmp.ne.s32.totalorder %s236, %s252
      %p254 = scmp.eq.s32.totalorder %s33, 0
      %p255 = por %p253, %p254
      %s256 = ssub.s32 %s35, %s42
      %p257 = scmp.eq.s32.totalorder %s256, 0
      %s259 = sadd.s32 %s258, 1
      %s260 = scalar_select %p257, %s258, %s259
      %p263 = pneg %p257
      %p264 = scmp.eq.s32.totalorder %s27, 3
      %p265 = por %p263, %p264
      %p266 = scmp.ne.s32.totalorder %s258, %s261
      %p267 = scmp.eq.s32.totalorder %s27, 0
      %p268 = por %p266, %p267
      %p269 = scmp.ne.s32.totalorder %s258, %s261
      %p270 = scmp.eq.s32.totalorder %s32, 3
      %p271 = por %p269, %p270
      %p272 = scmp.ne.s32.totalorder %s261, %s262
      %p273 = scmp.eq.s32.totalorder %s32, 0
      %p274 = por %p272, %p273
      %p275 = scmp.ne.s32.totalorder %s261, %s262
      %p276 = scmp.eq.s32.totalorder %s33, 3
      %p277 = por %p275, %p276
      %p279 = scmp.ne.s32.totalorder %s262, %s278
      %p280 = scmp.eq.s32.totalorder %s33, 0
      %p281 = por %p279, %p280
      %s282 = ssub.s32 %s35, %s42
      %p283 = scmp.eq.s32.totalorder %s282, 0
      %s285 = sadd.s32 %s284, 1
      %s286 = scalar_select %p283, %s284, %s285
      %p289 = pneg %p283
      %p290 = scmp.eq.s32.totalorder %s27, 3
      %p291 = por %p289, %p290
      %p292 = scmp.ne.s32.totalorder %s284, %s287
      %p293 = scmp.eq.s32.totalorder %s27, 0
      %p294 = por %p292, %p293
      %p295 = scmp.ne.s32.totalorder %s284, %s287
      %p296 = scmp.eq.s32.totalorder %s32, 3
      %p297 = por %p295, %p296
      %p298 = scmp.ne.s32.totalorder %s287, %s288
      %p299 = scmp.eq.s32.totalorder %s32, 0
      %p300 = por %p298, %p299
      %p301 = scmp.ne.s32.totalorder %s287, %s288
      %p302 = scmp.eq.s32.totalorder %s33, 3
      %p303 = por %p301, %p302
      %p305 = scmp.ne.s32.totalorder %s288, %s304
      %p306 = scmp.eq.s32.totalorder %s33, 0
      %p307 = por %p305, %p306
      %s308 = ssub.s32 %s35, %s42
      %p309 = scmp.eq.s32.totalorder %s308, 0
      %s311 = sadd.s32 %s310, 1
      %s312 = scalar_select %p309, %s310, %s311
      %p315 = pneg %p309
      %p316 = scmp.eq.s32.totalorder %s27, 3
      %p317 = por %p315, %p316
      %p318 = scmp.ne.s32.totalorder %s310, %s313
      %p319 = scmp.eq.s32.totalorder %s27, 0
      %p320 = por %p318, %p319
      %p321 = scmp.ne.s32.totalorder %s310, %s313
      %p322 = scmp.eq.s32.totalorder %s32, 3
      %p323 = por %p321, %p322
      %p324 = scmp.ne.s32.totalorder %s313, %s314
      %p325 = scmp.eq.s32.totalorder %s32, 0
      %p326 = por %p324, %p325
      %p327 = scmp.ne.s32.totalorder %s313, %s314
      %p328 = scmp.eq.s32.totalorder %s33, 3
      %p329 = por %p327, %p328
      %p331 = scmp.ne.s32.totalorder %s314, %s330
      %p332 = scmp.eq.s32.totalorder %s33, 0
      %p333 = por %p331, %p332
      %s334 = ssub.s32 %s35, %s42
      %p335 = scmp.eq.s32.totalorder %s334, 0
      %s337 = sadd.s32 %s336, 1
      %s338 = scalar_select %p335, %s336, %s337
      %p341 = pneg %p335
      %p342 = scmp.eq.s32.totalorder %s27, 3
      %p343 = por %p341, %p342
      %p344 = scmp.ne.s32.totalorder %s336, %s339
      %p345 = scmp.eq.s32.totalorder %s27, 0
      %p346 = por %p344, %p345
      %p347 = scmp.ne.s32.totalorder %s336, %s339
      %p348 = scmp.eq.s32.totalorder %s32, 3
      %p349 = por %p347, %p348
      %p350 = scmp.ne.s32.totalorder %s339, %s340
      %p351 = scmp.eq.s32.totalorder %s32, 0
      %p352 = por %p350, %p351
      %p353 = scmp.ne.s32.totalorder %s339, %s340
      %p354 = scmp.eq.s32.totalorder %s33, 3
      %p355 = por %p353, %p354
      %p357 = scmp.ne.s32.totalorder %s340, %s356
      %p358 = scmp.eq.s32.totalorder %s33, 0
      %p359 = por %p357, %p358
      %s360 = ssub.s32 %s35, %s42
      %p361 = scmp.eq.s32.totalorder %s360, 0
      %s363 = sadd.s32 %s362, 1
      %s364 = scalar_select %p361, %s362, %s363
      %p367 = pneg %p361
      %p368 = scmp.eq.s32.totalorder %s27, 3
      %p369 = por %p367, %p368
      %p370 = scmp.ne.s32.totalorder %s362, %s365
      %p371 = scmp.eq.s32.totalorder %s27, 0
      %p372 = por %p370, %p371
      %p373 = scmp.ne.s32.totalorder %s362, %s365
      %p374 = scmp.eq.s32.totalorder %s32, 3
      %p375 = por %p373, %p374
      %p376 = scmp.ne.s32.totalorder %s365, %s366
      %p377 = scmp.eq.s32.totalorder %s32, 0
      %p378 = por %p376, %p377
      %p379 = scmp.ne.s32.totalorder %s365, %s366
      %p380 = scmp.eq.s32.totalorder %s33, 3
      %p381 = por %p379, %p380
      %p383 = scmp.ne.s32.totalorder %s366, %s382
      %p384 = scmp.eq.s32.totalorder %s33, 0
      %p385 = por %p383, %p384
      %s386 = ssub.s32 %s35, %s42
      %p387 = scmp.eq.s32.totalorder %s386, 0
      %s389 = sadd.s32 %s388, 1
      %s390 = scalar_select %p387, %s388, %s389
      %p393 = pneg %p387
      %p394 = scmp.eq.s32.totalorder %s27, 3
      %p395 = por %p393, %p394
      %p396 = scmp.ne.s32.totalorder %s388, %s391
      %p397 = scmp.eq.s32.totalorder %s27, 0
      %p398 = por %p396, %p397
      %p399 = scmp.ne.s32.totalorder %s388, %s391
      %p400 = scmp.eq.s32.totalorder %s32, 3
      %p401 = por %p399, %p400
      %p402 = scmp.ne.s32.totalorder %s391, %s392
      %p403 = scmp.eq.s32.totalorder %s32, 0
      %p404 = por %p402, %p403
      %p405 = scmp.ne.s32.totalorder %s391, %s392
      %p406 = scmp.eq.s32.totalorder %s33, 3
      %p407 = por %p405, %p406
      %p409 = scmp.ne.s32.totalorder %s392, %s408
      %p410 = scmp.eq.s32.totalorder %s33, 0
      %p411 = por %p409, %p410
      %s412 = ssub.s32 %s35, %s42
      %p413 = scmp.eq.s32.totalorder %s412, 0
      %s415 = sadd.s32 %s414, 1
      %s416 = scalar_select %p413, %s414, %s415
      %p419 = pneg %p413
      %p420 = scmp.eq.s32.totalorder %s27, 3
      %p421 = por %p419, %p420
      %p422 = scmp.ne.s32.totalorder %s414, %s417
      %p423 = scmp.eq.s32.totalorder %s27, 0
      %p424 = por %p422, %p423
      %p425 = scmp.ne.s32.totalorder %s414, %s417
      %p426 = scmp.eq.s32.totalorder %s32, 3
      %p427 = por %p425, %p426
      %p428 = scmp.ne.s32.totalorder %s417, %s418
      %p429 = scmp.eq.s32.totalorder %s32, 0
      %p430 = por %p428, %p429
      %p431 = scmp.ne.s32.totalorder %s417, %s418
      %p432 = scmp.eq.s32.totalorder %s33, 3
      %p433 = por %p431, %p432
      %p435 = scmp.ne.s32.totalorder %s418, %s434
      %p436 = scmp.eq.s32.totalorder %s33, 0
      %p437 = por %p435, %p436
      %s438 = ssub.s32 %s35, %s42
      %p439 = scmp.eq.s32.totalorder %s438, 0
      %s441 = sadd.s32 %s440, 1
      %s442 = scalar_select %p439, %s440, %s441
      %p445 = pneg %p439
      %p446 = scmp.eq.s32.totalorder %s27, 3
      %p447 = por %p445, %p446
      %p448 = scmp.ne.s32.totalorder %s440, %s443
      %p449 = scmp.eq.s32.totalorder %s27, 0
      %p450 = por %p448, %p449
      %p451 = scmp.ne.s32.totalorder %s440, %s443
      %p452 = scmp.eq.s32.totalorder %s32, 3
      %p453 = por %p451, %p452
      %p454 = scmp.ne.s32.totalorder %s443, %s444
      %p455 = scmp.eq.s32.totalorder %s32, 0
      %p456 = por %p454, %p455
      %p457 = scmp.ne.s32.totalorder %s443, %s444
      %p458 = scmp.eq.s32.totalorder %s33, 3
      %p459 = por %p457, %p458
      %p461 = scmp.ne.s32.totalorder %s444, %s460
      %p462 = scmp.eq.s32.totalorder %s33, 0
      %p463 = por %p461, %p462
      %s464 = ssub.s32 %s35, %s42
      %p465 = scmp.eq.s32.totalorder %s464, 0
      %s467 = sadd.s32 %s466, 1
      %s468 = scalar_select %p465, %s466, %s467
      %p471 = pneg %p465
      %p472 = scmp.eq.s32.totalorder %s27, 3
      %p473 = por %p471, %p472
      %p474 = scmp.ne.s32.totalorder %s466, %s469
      %p475 = scmp.eq.s32.totalorder %s27, 0
      %p476 = por %p474, %p475
      %p477 = scmp.ne.s32.totalorder %s466, %s469
      %p478 = scmp.eq.s32.totalorder %s32, 3
      %p479 = por %p477, %p478
      %p480 = scmp.ne.s32.totalorder %s469, %s470
      %p481 = scmp.eq.s32.totalorder %s32, 0
      %p482 = por %p480, %p481
      %p483 = scmp.ne.s32.totalorder %s469, %s470
      %p484 = scmp.eq.s32.totalorder %s33, 3
      %p485 = por %p483, %p484
      %p487 = scmp.ne.s32.totalorder %s470, %s486
      %p488 = scmp.eq.s32.totalorder %s33, 0
      %p489 = por %p487, %p488
      %s490 = ssub.s32 %s34, %s46
      %p491 = scmp.eq.s32.totalorder %s490, 0
      %s493 = sadd.s32 %s492, 1
      %s494 = scalar_select %p491, %s492, %s493
      %p497 = pneg %p491
      %p498 = scmp.eq.s32.totalorder %s27, 3
      %p499 = por %p497, %p498
      %p500 = scmp.ne.s32.totalorder %s492, %s495
      %p501 = scmp.eq.s32.totalorder %s27, 0
      %p502 = por %p500, %p501
      %p503 = scmp.ne.s32.totalorder %s492, %s495
      %p504 = scmp.eq.s32.totalorder %s32, 3
      %p505 = por %p503, %p504
      %p506 = scmp.ne.s32.totalorder %s495, %s496
      %p507 = scmp.eq.s32.totalorder %s32, 0
      %p508 = por %p506, %p507
      %p509 = scmp.ne.s32.totalorder %s495, %s496
      %p510 = scmp.eq.s32.totalorder %s33, 3
      %p511 = por %p509, %p510
      %p513 = scmp.ne.s32.totalorder %s496, %s512
      %p514 = scmp.eq.s32.totalorder %s33, 0
      %p515 = por %p513, %p514
      %p516 = scmp.le.s32.totalorder 1, %s27
      %p517 = scmp.lt.s32.totalorder %s27, 5
      %p518 = pnand %p516, %p517
      %p519 = pneg %p518
      // Predicated region
      $region9: #{clip_vision_tower_forward.1} parent=5 // pred_check
        _
      $region10: #{clip_vision_tower_forward.1} parent=5 // pred_check_branch
        %521 = sbr.rel (%p518) target = $region12
      $region11: #{clip_vision_tower_forward.1} parent=5 // pred_region
        %s522 = ssub.s32 %s27, 1
        // Predicated region
        $region13: #{clip_vision_tower_forward.1} parent=11 // pred_check
          %p523 = pneg %p86
        $region14: #{clip_vision_tower_forward.1} parent=11 // pred_check_branch
          %525 = sbr.rel (%p523) target = $region16
        $region15: #{clip_vision_tower_forward.1} parent=11 // pred_region
          _
        $region16: #{clip_vision_tower_forward.1} parent=11 // pred_fallthru
          _
        // Predicated region
        $region17: #{clip_vision_tower_forward.1} parent=11 // pred_check
          %p526 = pneg %p107
        $region18: #{clip_vision_tower_forward.1} parent=11 // pred_check_branch
          %528 = sbr.rel (%p526) target = $region20
        $region19: #{clip_vision_tower_forward.1} parent=11 // pred_region
          _
        $region20: #{clip_vision_tower_forward.1} parent=11 // pred_fallthru
          _
        // Predicated region
        $region21: #{clip_vision_tower_forward.1} parent=11 // pred_check
          %p529 = pneg %p128
        $region22: #{clip_vision_tower_forward.1} parent=11 // pred_check_branch
          %531 = sbr.rel (%p529) target = $region24
        $region23: #{clip_vision_tower_forward.1} parent=11 // pred_region
          _
        $region24: #{clip_vision_tower_forward.1} parent=11 // pred_fallthru
          _
        // Predicated region
        $region25: #{clip_vision_tower_forward.1} parent=11 // pred_check
          %p532 = pneg %p149
        $region26: #{clip_vision_tower_forward.1} parent=11 // pred_check_branch
          %534 = sbr.rel (%p532) target = $region28
        $region27: #{clip_vision_tower_forward.1} parent=11 // pred_region
          _
        $region28: #{clip_vision_tower_forward.1} parent=11 // pred_fallthru
          _
        // Predicated region
        $region29: #{clip_vision_tower_forward.1} parent=11 // pred_check
          %p535 = pneg %p170
        $region30: #{clip_vision_tower_forward.1} parent=11 // pred_check_branch
          %537 = sbr.rel (%p535) target = $region32
        $region31: #{clip_vision_tower_forward.1} parent=11 // pred_region
          _
        $region32: #{clip_vision_tower_forward.1} parent=11 // pred_fallthru
          _
      $region12: #{clip_vision_tower_forward.1} parent=5 // pred_fallthru
        _
      %p538 = scmp.lt.s32.totalorder %s27, 4
      // Predicated region
      $region33: #{clip_vision_tower_forward.1} parent=5 // pred_check
        %p539 = pneg %p538
      $region34: #{clip_vision_tower_forward.1} parent=5 // pred_check_branch
        %541 = sbr.rel (%p539) target = $region36
      $region35: #{clip_vision_tower_forward.1} parent=5 // pred_region
        // Predicated region
        $region37: #{clip_vision_tower_forward.1} parent=35 // pred_check
          %p542 = pneg %p59
        $region38: #{clip_vision_tower_forward.1} parent=35 // pred_check_branch
          %544 = sbr.rel (%p542) target = $region40
        $region39: #{clip_vision_tower_forward.1} parent=35 // pred_region
          %p545 = scmp.lt.s32.totalorder %s34, 1
          %s546 = scalar_select %p545, %s34, 1
          %s547 = smul.addr %s546, 2
          %s548 = smul.addr %s547, 4
          %s549 = scalar_lea.vmem %s0, %s548
        $region40: #{clip_vision_tower_forward.1} parent=35 // pred_fallthru
          _
        // Predicated region
        $region41: #{clip_vision_tower_forward.1} parent=35 // pred_check
          %p550 = pneg %p190
        $region42: #{clip_vision_tower_forward.1} parent=35 // pred_check_branch
          %552 = sbr.rel (%p550) target = $region44
        $region43: #{clip_vision_tower_forward.1} parent=35 // pred_region
          %p553 = scmp.lt.s32.totalorder %s35, 1
          %s554 = scalar_select %p553, %s35, 1
          %s555 = scalar_lea.vmem %s6, %s554
        $region44: #{clip_vision_tower_forward.1} parent=35 // pred_fallthru
          _
        // Predicated region
        $region45: #{clip_vision_tower_forward.1} parent=35 // pred_check
          %p556 = pneg %p216
        $region46: #{clip_vision_tower_forward.1} parent=35 // pred_check_branch
          %558 = sbr.rel (%p556) target = $region48
        $region47: #{clip_vision_tower_forward.1} parent=35 // pred_region
          %p559 = scmp.lt.s32.totalorder %s35, 1
          %s560 = scalar_select %p559, %s35, 1
          %s561 = scalar_lea.vmem %s7, %s560
        $region48: #{clip_vision_tower_forward.1} parent=35 // pred_fallthru
          _
        // Predicated region
        $region49: #{clip_vision_tower_forward.1} parent=35 // pred_check
          %p562 = pneg %p242
        $region50: #{clip_vision_tower_forward.1} parent=35 // pred_check_branch
          %564 = sbr.rel (%p562) target = $region52
        $region51: #{clip_vision_tower_forward.1} parent=35 // pred_region
          %p565 = scmp.lt.s32.totalorder %s35, 1
          %s566 = scalar_select %p565, %s35, 1
          %s567 = smul.addr %s566, 4
          %s568 = smul.addr %s567, 4
          %s569 = scalar_lea.vmem %s8, %s568
        $region52: #{clip_vision_tower_forward.1} parent=35 // pred_fallthru
          _
        // Predicated region
        $region53: #{clip_vision_tower_forward.1} parent=35 // pred_check
          %p570 = pneg %p268
        $region54: #{clip_vision_tower_forward.1} parent=35 // pred_check_branch
          %572 = sbr.rel (%p570) target = $region56
        $region55: #{clip_vision_tower_forward.1} parent=35 // pred_region
          %p573 = scmp.lt.s32.totalorder %s35, 1
          %s574 = scalar_select %p573, %s35, 1
          %s575 = scalar_lea.vmem %s9, %s574
        $region56: #{clip_vision_tower_forward.1} parent=35 // pred_fallthru
          _
        // Predicated region
        $region57: #{clip_vision_tower_forward.1} parent=35 // pred_check
          %p576 = pneg %p294
        $region58: #{clip_vision_tower_forward.1} parent=35 // pred_check_branch
          %578 = sbr.rel (%p576) target = $region60
        $region59: #{clip_vision_tower_forward.1} parent=35 // pred_region
          %p579 = scmp.lt.s32.totalorder %s35, 1
          %s580 = scalar_select %p579, %s35, 1
          %s581 = smul.addr %s580, 4
          %s582 = smul.addr %s581, 4
          %s583 = scalar_lea.vmem %s10, %s582
        $region60: #{clip_vision_tower_forward.1} parent=35 // pred_fallthru
          _
        // Predicated region
        $region61: #{clip_vision_tower_forward.1} parent=35 // pred_check
          %p584 = pneg %p320
        $region62: #{clip_vision_tower_forward.1} parent=35 // pred_check_branch
          %586 = sbr.rel (%p584) target = $region64
        $region63: #{clip_vision_tower_forward.1} parent=35 // pred_region
          %p587 = scmp.lt.s32.totalorder %s35, 1
          %s588 = scalar_select %p587, %s35, 1
          %s589 = scalar_lea.vmem %s11, %s588
        $region64: #{clip_vision_tower_forward.1} parent=35 // pred_fallthru
          _
        // Predicated region
        $region65: #{clip_vision_tower_forward.1} parent=35 // pred_check
          %p590 = pneg %p346
        $region66: #{clip_vision_tower_forward.1} parent=35 // pred_check_branch
          %592 = sbr.rel (%p590) target = $region68
        $region67: #{clip_vision_tower_forward.1} parent=35 // pred_region
          %p593 = scmp.lt.s32.totalorder %s35, 1
          %s594 = scalar_select %p593, %s35, 1
          %s595 = scalar_lea.vmem %s12, %s594
        $region68: #{clip_vision_tower_forward.1} parent=35 // pred_fallthru
          _
        // Predicated region
        $region69: #{clip_vision_tower_forward.1} parent=35 // pred_check
          %p596 = pneg %p372
        $region70: #{clip_vision_tower_forward.1} parent=35 // pred_check_branch
          %598 = sbr.rel (%p596) target = $region72
        $region71: #{clip_vision_tower_forward.1} parent=35 // pred_region
          %p599 = scmp.lt.s32.totalorder %s35, 1
          %s600 = scalar_select %p599, %s35, 1
          %s601 = scalar_lea.vmem %s13, %s600
        $region72: #{clip_vision_tower_forward.1} parent=35 // pred_fallthru
          _
        // Predicated region
        $region73: #{clip_vision_tower_forward.1} parent=35 // pred_check
          %p602 = pneg %p398
        $region74: #{clip_vision_tower_forward.1} parent=35 // pred_check_branch
          %604 = sbr.rel (%p602) target = $region76
        $region75: #{clip_vision_tower_forward.1} parent=35 // pred_region
          %p605 = scmp.lt.s32.totalorder %s35, 1
          %s606 = scalar_select %p605, %s35, 1
          %s607 = smul.addr %s606, 4
          %s608 = smul.addr %s607, 4
          %s609 = scalar_lea.vmem %s14, %s608
        $region76: #{clip_vision_tower_forward.1} parent=35 // pred_fallthru
          _
        // Predicated region
        $region77: #{clip_vision_tower_forward.1} parent=35 // pred_check
          %p610 = pneg %p424
        $region78: #{clip_vision_tower_forward.1} parent=35 // pred_check_branch
          %612 = sbr.rel (%p610) target = $region80
        $region79: #{clip_vision_tower_forward.1} parent=35 // pred_region
          %p613 = scmp.lt.s32.totalorder %s35, 1
          %s614 = scalar_select %p613, %s35, 1
          %s615 = scalar_lea.vmem %s15, %s614
        $region80: #{clip_vision_tower_forward.1} parent=35 // pred_fallthru
          _
        // Predicated region
        $region81: #{clip_vision_tower_forward.1} parent=35 // pred_check
          %p616 = pneg %p450
        $region82: #{clip_vision_tower_forward.1} parent=35 // pred_check_branch
          %618 = sbr.rel (%p616) target = $region84
        $region83: #{clip_vision_tower_forward.1} parent=35 // pred_region
          %p619 = scmp.lt.s32.totalorder %s35, 1
          %s620 = scalar_select %p619, %s35, 1
          %s621 = smul.addr %s620, 8
          %s622 = smul.addr %s621, 4
          %s623 = scalar_lea.vmem %s16, %s622
        $region84: #{clip_vision_tower_forward.1} parent=35 // pred_fallthru
          _
        // Predicated region
        $region85: #{clip_vision_tower_forward.1} parent=35 // pred_check
          %p624 = pneg %p476
        $region86: #{clip_vision_tower_forward.1} parent=35 // pred_check_branch
          %626 = sbr.rel (%p624) target = $region88
        $region87: #{clip_vision_tower_forward.1} parent=35 // pred_region
          %p627 = scmp.lt.s32.totalorder %s35, 1
          %s628 = scalar_select %p627, %s35, 1
          %s629 = scalar_lea.vmem %s17, %s628
        $region88: #{clip_vision_tower_forward.1} parent=35 // pred_fallthru
          _
      $region36: #{clip_vision_tower_forward.1} parent=5 // pred_fallthru
        _
      %p630 = scmp.le.s32.totalorder 1, %s27
      %p631 = scmp.lt.s32.totalorder %s27, 5
      %p632 = pnand %p630, %p631
      %p633 = pneg %p632
      // Predicated region
      $region89: #{clip_vision_tower_forward.1} parent=5 // pred_check
        _
      $region90: #{clip_vision_tower_forward.1} parent=5 // pred_check_branch
        %635 = sbr.rel (%p632) target = $region92
      $region91: #{clip_vision_tower_forward.1} parent=5 // pred_region
        %s636 = ssub.s32 %s27, 1
        %p637 = scmp.lt.s32.totalorder %s36, 1
        %s638 = scalar_select %p637, %s36, 1
        %s639 = smul.addr %s638, 2
        %s640 = smul.addr %s639, 4
        %s641 = scalar_lea.vmem %s0, %s640
        %p642 = pneg %p65
        %p643 = pneg %p62
        %p644 = pneg %p86
        %p645 = pneg %p83
        %p646 = pneg %p107
        %p647 = pneg %p104
        %p648 = pneg %p128
        %p649 = pneg %p125
        %p650 = pneg %p149
        %p651 = pneg %p146
        %p652 = pneg %p170
        %p653 = pneg %p167
        %p654 = scmp.lt.s32.totalorder %s37, 1
        %s655 = scalar_select %p654, %s37, 1
        %s656 = scalar_lea.vmem %s6, %s655
        %p657 = pneg %p196
        %p658 = pneg %p193
        %p659 = scmp.lt.s32.totalorder %s37, 1
        %s660 = scalar_select %p659, %s37, 1
        %s661 = scalar_lea.vmem %s7, %s660
        %p662 = pneg %p222
        %p663 = pneg %p219
        %p664 = scmp.lt.s32.totalorder %s37, 1
        %s665 = scalar_select %p664, %s37, 1
        %s666 = smul.addr %s665, 4
        %s667 = smul.addr %s666, 4
        %s668 = scalar_lea.vmem %s8, %s667
        %p669 = pneg %p248
        %p670 = pneg %p245
        %p671 = scmp.lt.s32.totalorder %s37, 1
        %s672 = scalar_select %p671, %s37, 1
        %s673 = scalar_lea.vmem %s9, %s672
        %p674 = pneg %p274
        %p675 = pneg %p271
        %p676 = scmp.lt.s32.totalorder %s37, 1
        %s677 = scalar_select %p676, %s37, 1
        %s678 = smul.addr %s677, 4
        %s679 = smul.addr %s678, 4
        %s680 = scalar_lea.vmem %s10, %s679
        %p681 = pneg %p300
        %p682 = pneg %p297
        %p683 = scmp.lt.s32.totalorder %s37, 1
        %s684 = scalar_select %p683, %s37, 1
        %s685 = scalar_lea.vmem %s11, %s684
        %p686 = pneg %p326
        %p687 = pneg %p323
        %p688 = scmp.lt.s32.totalorder %s37, 1
        %s689 = scalar_select %p688, %s37, 1
        %s690 = scalar_lea.vmem %s12, %s689
        %p691 = pneg %p352
        %p692 = pneg %p349
        %p693 = scmp.lt.s32.totalorder %s37, 1
        %s694 = scalar_select %p693, %s37, 1
        %s695 = scalar_lea.vmem %s13, %s694
        %p696 = pneg %p378
        %p697 = pneg %p375
        %p698 = scmp.lt.s32.totalorder %s37, 1
        %s699 = scalar_select %p698, %s37, 1
        %s700 = smul.addr %s699, 4
        %s701 = smul.addr %s700, 4
        %s702 = scalar_lea.vmem %s14, %s701
        %p703 = pneg %p404
        %p704 = pneg %p401
        %p705 = scmp.lt.s32.totalorder %s37, 1
        %s706 = scalar_select %p705, %s37, 1
        %s707 = scalar_lea.vmem %s15, %s706
        %p708 = pneg %p430
        %p709 = pneg %p427
        %p710 = scmp.lt.s32.totalorder %s37, 1
        %s711 = scalar_select %p710, %s37, 1
        %s712 = smul.addr %s711, 8
        %s713 = smul.addr %s712, 4
        %s714 = scalar_lea.vmem %s16, %s713
        %p715 = pneg %p456
        %p716 = pneg %p453
        %p717 = scmp.lt.s32.totalorder %s37, 1
        %s718 = scalar_select %p717, %s37, 1
        %s719 = scalar_lea.vmem %s17, %s718
        %p720 = pneg %p482
        %p721 = pneg %p479
        %p722 = pneg %p508
        %p723 = pneg %p505
        %s724 = sand.u32 %s495, 1
        %s725 = scalar_lea.sflag [#allocation4], %s724
        %s726 = sand.u32 %s495, 1
        %s727 = smul.addr %s726, 16
        %s728 = scalar_lea.vmem [#allocation3], %s727
        %p729 = scmp.lt.s32.totalorder %s36, 1
        %s730 = scalar_select %p729, %s36, 1
        %s731 = smul.addr %s730, 2
        %s732 = smul.addr %s731, 4
        %s733 = scalar_lea.vmem %s0, %s732
        %p734 = scmp.lt.s32.totalorder %s37, 1
        %s735 = scalar_select %p734, %s37, 1
        %s736 = scalar_lea.vmem %s6, %s735
        %p737 = scmp.lt.s32.totalorder %s37, 1
        %s738 = scalar_select %p737, %s37, 1
        %s739 = scalar_lea.vmem %s7, %s738
        %p740 = scmp.lt.s32.totalorder %s37, 1
        %s741 = scalar_select %p740, %s37, 1
        %s742 = smul.addr %s741, 4
        %s743 = smul.addr %s742, 4
        %s744 = scalar_lea.vmem %s8, %s743
        %p745 = scmp.lt.s32.totalorder %s37, 1
        %s746 = scalar_select %p745, %s37, 1
        %s747 = scalar_lea.vmem %s9, %s746
        %p748 = scmp.lt.s32.totalorder %s37, 1
        %s749 = scalar_select %p748, %s37, 1
        %s750 = smul.addr %s749, 4
        %s751 = smul.addr %s750, 4
        %s752 = scalar_lea.vmem %s10, %s751
        %p753 = scmp.lt.s32.totalorder %s37, 1
        %s754 = scalar_select %p753, %s37, 1
        %s755 = scalar_lea.vmem %s11, %s754
        %p756 = scmp.lt.s32.totalorder %s37, 1
        %s757 = scalar_select %p756, %s37, 1
        %s758 = scalar_lea.vmem %s12, %s757
        %p759 = scmp.lt.s32.totalorder %s37, 1
        %s760 = scalar_select %p759, %s37, 1
        %s761 = scalar_lea.vmem %s13, %s760
        %p762 = scmp.lt.s32.totalorder %s37, 1
        %s763 = scalar_select %p762, %s37, 1
        %s764 = smul.addr %s763, 4
        %s765 = smul.addr %s764, 4
        %s766 = scalar_lea.vmem %s14, %s765
        %p767 = scmp.lt.s32.totalorder %s37, 1
        %s768 = scalar_select %p767, %s37, 1
        %s769 = scalar_lea.vmem %s15, %s768
        %p770 = scmp.lt.s32.totalorder %s37, 1
        %s771 = scalar_select %p770, %s37, 1
        %s772 = smul.addr %s771, 8
        %s773 = smul.addr %s772, 4
        %s774 = scalar_lea.vmem %s16, %s773
        %p775 = scmp.lt.s32.totalorder %s37, 1
        %s776 = scalar_select %p775, %s37, 1
        %s777 = scalar_lea.vmem %s17, %s776
        %p779 = scmp.eq.s32.totalorder %s37, 0
        // Predicated region
        $region93: #{clip_vision_tower_forward.1} parent=91 // pred_check
          %p780 = pneg %p779
        $region94: #{clip_vision_tower_forward.1} parent=91 // pred_check_branch
          %782 = sbr.rel (%p780) target = $region96
        $region95: #{clip_vision_tower_forward.1} parent=91 // pred_region
          %v783 = vld [vmem:[%s4] sm:$0x1]
          %v784 = vld [vmem:[%s5] sm:$0x1]
          %v785 = vld [vmem:[%s733] sm:$0xf]
          %v786 = vld [vmem:[%s733 + $0x4] sm:$0xf]
          %v787 = vld [vmem:[%s1] sm:$0xf]
          %v788 = vld [vmem:[%s1 + $0x4] sm:$0xf]
          %v789 = vld [vmem:[%s1 + $0x8] sm:$0xf]
          %v790 = vld [vmem:[%s1 + $0xc] sm:$0xf]
          %v791 = vld [vmem:[%s1 + $0x10] sm:$0xf]
          %v792 = vld [vmem:[%s1 + $0x14] sm:$0xf]
          %v793 = vld [vmem:[%s3] sm:$0xff]
          %v794 = vld [vmem:[%s3 + $0x8] sm:$0xff]
          %v797 = vunpack.c.l.b16 %v785
          %v798 = vunpack.c.l.b16 %v786
          %v799 = vpack.c.b16 %v798, %v797
          %v806 = vunpack.c.l.b16 %v787
          %v807 = vunpack.c.l.b16 %v788
          %v808 = vunpack.c.l.b16 %v789
          %v809 = vunpack.c.l.b16 %v790
          %v810 = vunpack.c.l.b16 %v791
          %v811 = vunpack.c.l.b16 %v792
          %v812 = vpack.c.b16 %v807, %v806
          %v813 = vpack.c.b16 %v809, %v808
          %v814 = vpack.c.b16 %v811, %v810
          %vm818 = vcmask 392192
          %v820 = vsel %vm818, %v799, 0
          %822 = vmatpush.bf16.msra.mxu0 0
          %823 = vmatpush.bf16.msra.mxu0 0
          %824 = vmatpush.bf16.msra.mxu0 0
          %825 = vmatpush.bf16.msra.mxu0 0
          %826 = vmatpush.bf16.msra.mxu0 0
          %827 = vmatpush.bf16.msra.mxu0 %v814
          %828 = vmatpush.bf16.msra.mxu0 %v813
          %829 = vmatpush.bf16.msra.mxu0 %v812
          %830 = vmatmul.bf16.gmra.mxu0 %v820
          %v831 = vpop.f32.mrf.mxu0
          %v832 = vadd.f32 %v793, %v831
          %v833 = vpop.f32.mrf.mxu0
          %v834 = vadd.f32 %v794, %v833
          %835 = vdwg.mxu0
          %vm836 = vcmask 261120
          %v837 = vsel %vm836, %v832, 0.0
          %838 = vadd.xlane.f32.xlu0 %v837
          %v839 = vpop.xlane.xlu0 %838
          %v840 = vsel %vm836, %v834, 0.0
          %841 = vadd.xlane.f32.xlu0 %v840
          %v842 = vpop.xlane.xlu0 %841
          %v843 = vrcp.pop 32.0
          %v844 = vmul.f32 32.0, %v843
          %v845 = vsub.f32 1.0, %v844
          %v846 = vmul.f32 %v843, %v845
          %v847 = vadd.f32 %v843, %v846
          %vm848 = vweird.f32 %v843
          %v849 = vsel %vm848, %v843, %v847
          %v850 = vmul.f32 %v839, %v849
          %v851 = vmul.f32 %v842, %v849
          %v852 = vsub.f32 %v832, %v850
          %v853 = vsub.f32 %v834, %v851
          %v854 = vmul.f32 %v852, %v852
          %v855 = vmul.f32 %v853, %v853
          %v856 = vsel %vm836, %v854, 0.0
          %857 = vadd.xlane.f32.xlu0 %v856
          %v858 = vpop.xlane.xlu0 %857
          %v859 = vsel %vm836, %v855, 0.0
          %860 = vadd.xlane.f32.xlu0 %v859
          %v861 = vpop.xlane.xlu0 %860
          %v862 = vmul.f32 %v858, %v849
          %v863 = vmul.f32 %v861, %v849
          %v864 = vadd.f32 %v862, 1e-05
          %v865 = vadd.f32 %v863, 1e-05
          %v866 = vrsqrt.pop %v864
          %v867 = vmul.f32 %v866, %v864
          %v868 = vmul.f32 %v867, %v866
          %v869 = vmul.f32 0.5, %v868
          %v870 = vsub.f32 1.5, %v869
          %v871 = vmul.f32 %v866, %v870
          %vm872 = vweird.f32 %v864
          %vm873 = vweird.f32 %v866
          %vm874 = vmor %vm872, %vm873
          %v875 = vsel %vm874, %v866, %v871
          %v876 = vrsqrt.pop %v865
          %v877 = vmul.f32 %v876, %v865
          %v878 = vmul.f32 %v877, %v876
          %v879 = vmul.f32 0.5, %v878
          %v880 = vsub.f32 1.5, %v879
          %v881 = vmul.f32 %v876, %v880
          %vm882 = vweird.f32 %v865
          %vm883 = vweird.f32 %v876
          %vm884 = vmor %vm882, %vm883
          %v885 = vsel %vm884, %v876, %v881
          %v886 = vmul.f32 %v852, %v875
          %v887 = vmul.f32 %v853, %v885
          %v889 = vperm.slane %v783, 0
          %v891 = vmul.f32 %v886, %v889
          %v892 = vmul.f32 %v887, %v889
          %v894 = vperm.slane %v784, 0
          %v896 = vadd.f32 %v891, %v894
          %v897 = vadd.f32 %v892, %v894
          %898 = vst.msk [vmem:[#allocation2] sm:$0xff] %vm836, %v896
          %899 = vst.msk [vmem:[#allocation2 + $0x8] sm:$0xff] %vm836, %v897
          %v900 = vld [vmem:[%s2] sm:$0x1]
          %v901 = vld [vmem:[%s3 + $0x10] sm:$0x1]
          %v902 = vadd.f32 %v900, %v901
          %vm903 = vcmask 253952
          %v904 = vsel %vm903, %v902, 0.0
          %905 = vadd.xlane.f32.xlu0 %v904
          %v906 = vpop.xlane.xlu0 %905
          %v907 = vmul.f32 %v906, %v849
          %v908 = vsub.f32 %v902, %v907
          %v909 = vmul.f32 %v908, %v908
          %v910 = vsel %vm903, %v909, 0.0
          %911 = vadd.xlane.f32.xlu0 %v910
          %v912 = vpop.xlane.xlu0 %911
          %v913 = vmul.f32 %v912, %v849
          %v914 = vadd.f32 %v913, 1e-05
          %v915 = vrsqrt.pop %v914
          %v916 = vmul.f32 %v915, %v914
          %v917 = vmul.f32 %v916, %v915
          %v918 = vmul.f32 0.5, %v917
          %v919 = vsub.f32 1.5, %v918
          %v920 = vmul.f32 %v915, %v919
          %vm921 = vweird.f32 %v914
          %vm922 = vweird.f32 %v915
          %vm923 = vmor %vm921, %vm922
          %v924 = vsel %vm923, %v915, %v920
          %v925 = vmul.f32 %v908, %v924
          %v926 = vmul.f32 %v925, %v783
          %v927 = vadd.f32 %v926, %v784
          %928 = vst.msk [vmem:[#allocation2 + $0x10] sm:$0x1] %vm903, %v927
          %vm929 = vcmask 260096
          %930 = vst.msk [vmem:[#allocation2 + $0x11] sm:$0x7f] %vm929, 0.0
        $region96: #{clip_vision_tower_forward.1} parent=91 // pred_fallthru
          _
        %v931 = vld [vmem:[#allocation2] sm:$0xff]
        %v932 = vld [vmem:[#allocation2 + $0x8] sm:$0xff]
        %v933 = vld [vmem:[#allocation2 + $0x10] sm:$0xff]
        %v934 = vld [vmem:[%s736] sm:$0x1]
        %v935 = vld [vmem:[%s739] sm:$0x1]
        %vm936 = vcmask 261120
        %v937 = vsel %vm936, %v931, 0.0
        %938 = vadd.xlane.f32.xlu0 %v937
        %v939 = vpop.xlane.xlu0 %938
        %v940 = vsel %vm936, %v932, 0.0
        %941 = vadd.xlane.f32.xlu0 %v940
        %v942 = vpop.xlane.xlu0 %941
        %v943 = vsel %vm936, %v933, 0.0
        %944 = vadd.xlane.f32.xlu0 %v943
        %v945 = vpop.xlane.xlu0 %944
        %v946 = vrcp.pop 32.0
        %v947 = vmul.f32 32.0, %v946
        %v948 = vsub.f32 1.0, %v947
        %v949 = vmul.f32 %v946, %v948
        %v950 = vadd.f32 %v946, %v949
        %vm951 = vweird.f32 %v946
        %v952 = vsel %vm951, %v946, %v950
        %v953 = vmul.f32 %v939, %v952
        %v954 = vmul.f32 %v942, %v952
        %v955 = vmul.f32 %v945, %v952
        %v956 = vsub.f32 %v931, %v953
        %v957 = vsub.f32 %v932, %v954
        %v958 = vsub.f32 %v933, %v955
        %v959 = vmul.f32 %v956, %v956
        %v960 = vmul.f32 %v957, %v957
        %v961 = vmul.f32 %v958, %v958
        %v962 = vsel %vm936, %v959, 0.0
        %963 = vadd.xlane.f32.xlu0 %v962
        %v964 = vpop.xlane.xlu0 %963
        %v965 = vsel %vm936, %v960, 0.0
        %966 = vadd.xlane.f32.xlu0 %v965
        %v967 = vpop.xlane.xlu0 %966
        %v968 = vsel %vm936, %v961, 0.0
        %969 = vadd.xlane.f32.xlu0 %v968
        %v970 = vpop.xlane.xlu0 %969
        %v971 = vmul.f32 %v964, %v952
        %v972 = vmul.f32 %v967, %v952
        %v973 = vmul.f32 %v970, %v952
        %v974 = vadd.f32 %v971, 1e-05
        %v975 = vadd.f32 %v972, 1e-05
        %v976 = vadd.f32 %v973, 1e-05
        %v977 = vrsqrt.pop %v974
        %v978 = vmul.f32 %v977, %v974
        %v979 = vmul.f32 %v978, %v977
        %v980 = vmul.f32 0.5, %v979
        %v981 = vsub.f32 1.5, %v980
        %v982 = vmul.f32 %v977, %v981
        %vm983 = vweird.f32 %v974
        %vm984 = vweird.f32 %v977
        %vm985 = vmor %vm983, %vm984
        %v986 = vsel %vm985, %v977, %v982
        %v987 = vrsqrt.pop %v975
        %v988 = vmul.f32 %v987, %v975
        %v989 = vmul.f32 %v988, %v987
        %v990 = vmul.f32 0.5, %v989
        %v991 = vsub.f32 1.5, %v990
        %v992 = vmul.f32 %v987, %v991
        %vm993 = vweird.f32 %v975
        %vm994 = vweird.f32 %v987
        %vm995 = vmor %vm993, %vm994
        %v996 = vsel %vm995, %v987, %v992
        %v997 = vrsqrt.pop %v976
        %v998 = vmul.f32 %v997, %v976
        %v999 = vmul.f32 %v998, %v997
        %v1000 = vmul.f32 0.5, %v999
        %v1001 = vsub.f32 1.5, %v1000
        %v1002 = vmul.f32 %v997, %v1001
        %vm1003 = vweird.f32 %v976
        %vm1004 = vweird.f32 %v997
        %vm1005 = vmor %vm1003, %vm1004
        %v1006 = vsel %vm1005, %v997, %v1002
        %v1007 = vmul.f32 %v956, %v986
        %v1008 = vmul.f32 %v957, %v996
        %v1009 = vmul.f32 %v958, %v1006
        %v1011 = vperm.slane %v934, 0
        %v1013 = vmul.f32 %v1007, %v1011
        %v1014 = vmul.f32 %v1008, %v1011
        %v1015 = vmul.f32 %v1009, %v1011
        %v1017 = vperm.slane %v935, 0
        %v1019 = vadd.f32 %v1013, %v1017
        %v1020 = vadd.f32 %v1014, %v1017
        %v1021 = vadd.f32 %v1015, %v1017
        %v1022 = vpack.c.bf16 %v1020, %v1019
        %v1023 = vpack.c.bf16 %v1021, %v1021
        %v1024 = vld [vmem:[%s744] sm:$0xf]
        %v1025 = vld [vmem:[%s744 + $0x4] sm:$0xf]
        %v1026 = vld [vmem:[%s744 + $0x8] sm:$0xf]
        %v1027 = vld [vmem:[%s744 + $0xc] sm:$0xf]
        %v1028 = vld [vmem:[%s747] sm:$0x1]
        %v1030 = vperm.slane %v1028, 0
        %v1036 = vunpack.c.l.b16 %v1024
        %v1037 = vunpack.c.l.b16 %v1025
        %v1038 = vunpack.c.l.b16 %v1026
        %v1039 = vunpack.c.l.b16 %v1027
        %v1040 = vpack.c.b16 %v1037, %v1036
        %v1041 = vpack.c.b16 %v1039, %v1038
        %v1045 = vsel %vm936, %v1022, 0
        %v1048 = vsel %vm936, %v1023, 0
        %1050 = vmatpush.bf16.msra.mxu0 0
        %1051 = vmatpush.bf16.msra.mxu0 0
        %1052 = vmatpush.bf16.msra.mxu0 0
        %1053 = vmatpush.bf16.msra.mxu0 0
        %1054 = vmatpush.bf16.msra.mxu0 0
        %1055 = vmatpush.bf16.msra.mxu0 0
        %1056 = vmatpush.bf16.msra.mxu0 %v1041
        %1057 = vmatpush.bf16.msra.mxu0 %v1040
        %1058 = vmatmul.bf16.gmra.mxu0 %v1045
        %v1059 = vpop.f32.mrf.mxu0
        %v1060 = vadd.f32 %v1030, %v1059
        %v1061 = vpop.f32.mrf.mxu0
        %v1062 = vadd.f32 %v1030, %v1061
        %1063 = vmatmul.bf16.gmra.mxu0 %v1048
        %v1064 = vpop.f32.mrf.mxu0
        %v1065 = vadd.f32 %v1030, %v1064
        %v1066 = vpop.f32.mrf.mxu0
        %1067 = vdwg.mxu0
        %v1068 = vpack.c.bf16 %v1060, %v1060
        %v1069 = vpack.c.bf16 %v1062, %v1062
        %v1070 = vpack.c.bf16 %v1065, %v1065
        %v1071 = vlaneseq
        %v1072 = vand.u32 %v1071, 127
        %vm1073 = vcmp.lt.s32.totalorder %v1072, 17
        %v1074 = vsel %vm1073, 0.0, -1e+30
        %v1078 = vunpack.c.l.b16 %v1068
        %v1079 = vunpack.c.l.b16 %v1069
        %v1080 = vunpack.c.l.b16 %v1070
        %v1081 = vpack.c.b16 %v1079, %v1078
        %v1082 = vpack.c.b16 %v1080, %v1080
        %1083 = vrot.lane.b32.xlu0 %v1081, 96
        %v1084 = vpop.permute.xlu0 %1083
        %1085 = vrot.lane.b32.xlu0 %v1082, 96
        %v1086 = vpop.permute.xlu0 %1085
        %vm1087 = vcmask 64512
        %v1089 = vsel %vm1087, %v1081, 0
        %v1092 = vsel %vm1087, %v1082, 0
        %v1095 = vsel %vm1087, %v1084, 0
        %v1098 = vsel %vm1087, %v1086, 0
        %1100 = vmatpush.bf16.xpose.msra.mxu0 0
        %1101 = vmatpush.bf16.xpose.msra.mxu0 0
        %1102 = vmatpush.bf16.xpose.msra.mxu0 0
        %1103 = vmatpush.bf16.xpose.msra.mxu0 0
        %1104 = vmatpush.bf16.xpose.msra.mxu0 0
        %1105 = vmatpush.bf16.xpose.msra.mxu0 0
        %1106 = vmatpush.bf16.xpose.msra.mxu0 %v1098
        %1107 = vmatpush.bf16.xpose.msra.mxu0 %v1095
        %1108 = vmatmul.bf16.gmra.mxu0 %v1089
        %v1109 = vpop.f32.mrf.mxu0
        %v1110 = vadd.f32 %v1074, %v1109
        %v1111 = vpop.f32.mrf.mxu0
        %v1112 = vadd.f32 %v1074, %v1111
        %1113 = vmatmul.bf16.gmra.mxu0 %v1092
        %v1114 = vpop.f32.mrf.mxu0
        %v1115 = vadd.f32 %v1074, %v1114
        %v1116 = vpop.f32.mrf.mxu0
        %1117 = vdwg.mxu0
        %vm1118 = vcmask 195584
        %v1119 = vsel %vm1118, %v1110, -inf
        %1120 = vmax.xlane.f32.xlu0 %v1119
        %v1121 = vpop.xlane.xlu0 %1120
        %v1122 = vsel %vm1118, %v1112, -inf
        %1123 = vmax.xlane.f32.xlu0 %v1122
        %v1124 = vpop.xlane.xlu0 %1123
        %v1125 = vsel %vm1118, %v1115, -inf
        %1126 = vmax.xlane.f32.xlu0 %v1125
        %v1127 = vpop.xlane.xlu0 %1126
        %v1128 = vsub.f32 %v1110, %v1121
        %v1129 = vsub.f32 %v1112, %v1124
        %v1130 = vsub.f32 %v1115, %v1127
        %v1131 = vmul.f32 %v1128, 1.442695
        %v1132 = vpow.pop %v1131
        %v1133 = vmul.f32 %v1129, 1.442695
        %v1134 = vpow.pop %v1133
        %v1135 = vmul.f32 %v1130, 1.442695
        %v1136 = vpow.pop %v1135
        %v1137 = vsel %vm1118, %v1132, 0.0
        %1138 = vadd.xlane.f32.xlu0 %v1137
        %v1139 = vpop.xlane.xlu0 %1138
        %v1140 = vsel %vm1118, %v1134, 0.0
        %1141 = vadd.xlane.f32.xlu0 %v1140
        %v1142 = vpop.xlane.xlu0 %1141
        %v1143 = vsel %vm1118, %v1136, 0.0
        %1144 = vadd.xlane.f32.xlu0 %v1143
        %v1145 = vpop.xlane.xlu0 %1144
        %v1146 = vrcp.pop %v1139
        %v1147 = vrcp.pop %v1142
        %v1148 = vrcp.pop %v1145
        %v1149 = vmul.f32 %v1132, %v1146
        %v1150 = vmul.f32 %v1134, %v1147
        %v1151 = vmul.f32 %v1136, %v1148
        %v1152 = vpack.c.bf16 %v1150, %v1149
        %v1153 = vpack.c.bf16 %v1151, %v1151
        %1154 = vrot.lane.b32.xlu0 %v1081, 64
        %v1155 = vpop.permute.xlu0 %1154
        %1156 = vrot.lane.b32.xlu0 %v1082, 64
        %v1157 = vpop.permute.xlu0 %1156
        %v1160 = vsel %vm1118, %v1152, 0
        %v1163 = vsel %vm1118, %v1153, 0
        %vm1165 = vcmask 1043456
        %v1167 = vsel %vm1165, %v1157, 0
        %1169 = vmatpush.bf16.msra.mxu0 0
        %1170 = vmatpush.bf16.msra.mxu0 0
        %1171 = vmatpush.bf16.msra.mxu0 0
        %1172 = vmatpush.bf16.msra.mxu0 0
        %1173 = vmatpush.bf16.msra.mxu0 0
        %1174 = vmatpush.bf16.msra.mxu0 0
        %1175 = vmatpush.bf16.msra.mxu0 %v1167
        %1176 = vmatpush.bf16.msra.mxu0 %v1155
        %1177 = vmatmul.bf16.gmra.mxu0 %v1160
        %v1178 = vpop.f32.mrf.mxu0
        %v1179 = vadd.f32 0.0, %v1178
        %v1180 = vpop.f32.mrf.mxu0
        %v1181 = vadd.f32 0.0, %v1180
        %1182 = vmatmul.bf16.gmra.mxu0 %v1163
        %v1183 = vpop.f32.mrf.mxu0
        %v1184 = vadd.f32 0.0, %v1183
        %v1185 = vpop.f32.mrf.mxu0
        %1186 = vdwg.mxu0
        %1187 = vrot.lane.b32.xlu0 %v1081, 120
        %v1188 = vpop.permute.xlu0 %1187
        %1189 = vrot.lane.b32.xlu0 %v1082, 120
        %v1190 = vpop.permute.xlu0 %1189
        %1191 = vrot.lane.b32.xlu0 %v1081, 88
        %v1192 = vpop.permute.xlu0 %1191
        %1193 = vrot.lane.b32.xlu0 %v1082, 88
        %v1194 = vpop.permute.xlu0 %1193
        %v1196 = vsel %vm1087, %v1188, 0
        %v1199 = vsel %vm1087, %v1190, 0
        %v1202 = vsel %vm1087, %v1192, 0
        %v1205 = vsel %vm1087, %v1194, 0
        %1207 = vmatpush.bf16.xpose.msra.mxu0 0
        %1208 = vmatpush.bf16.xpose.msra.mxu0 0
        %1209 = vmatpush.bf16.xpose.msra.mxu0 0
        %1210 = vmatpush.bf16.xpose.msra.mxu0 0
        %1211 = vmatpush.bf16.xpose.msra.mxu0 0
        %1212 = vmatpush.bf16.xpose.msra.mxu0 0
        %1213 = vmatpush.bf16.xpose.msra.mxu0 %v1205
        %1214 = vmatpush.bf16.xpose.msra.mxu0 %v1202
        %1215 = vmatmul.bf16.gmra.mxu0 %v1196
        %v1216 = vpop.f32.mrf.mxu0
        %v1217 = vadd.f32 %v1074, %v1216
        %v1218 = vpop.f32.mrf.mxu0
        %v1219 = vadd.f32 %v1074, %v1218
        %1220 = vmatmul.bf16.gmra.mxu0 %v1199
        %v1221 = vpop.f32.mrf.mxu0
        %v1222 = vadd.f32 %v1074, %v1221
        %v1223 = vpop.f32.mrf.mxu0
        %1224 = vdwg.mxu0
        %v1225 = vsel %vm1118, %v1217, -inf
        %1226 = vmax.xlane.f32.xlu0 %v1225
        %v1227 = vpop.xlane.xlu0 %1226
        %v1228 = vsel %vm1118, %v1219, -inf
        %1229 = vmax.xlane.f32.xlu0 %v1228
        %v1230 = vpop.xlane.xlu0 %1229
        %v1231 = vsel %vm1118, %v1222, -inf
        %1232 = vmax.xlane.f32.xlu0 %v1231
        %v1233 = vpop.xlane.xlu0 %1232
        %v1234 = vsub.f32 %v1217, %v1227
        %v1235 = vsub.f32 %v1219, %v1230
        %v1236 = vsub.f32 %v1222, %v1233
        %v1237 = vmul.f32 %v1234, 1.442695
        %v1238 = vpow.pop %v1237
        %v1239 = vmul.f32 %v1235, 1.442695
        %v1240 = vpow.pop %v1239
        %v1241 = vmul.f32 %v1236, 1.442695
        %v1242 = vpow.pop %v1241
        %v1243 = vsel %vm1118, %v1238, 0.0
        %1244 = vadd.xlane.f32.xlu0 %v1243
        %v1245 = vpop.xlane.xlu0 %1244
        %v1246 = vsel %vm1118, %v1240, 0.0
        %1247 = vadd.xlane.f32.xlu0 %v1246
        %v1248 = vpop.xlane.xlu0 %1247
        %v1249 = vsel %vm1118, %v1242, 0.0
        %1250 = vadd.xlane.f32.xlu0 %v1249
        %v1251 = vpop.xlane.xlu0 %1250
        %v1252 = vrcp.pop %v1245
        %v1253 = vrcp.pop %v1248
        %v1254 = vrcp.pop %v1251
        %v1255 = vmul.f32 %v1238, %v1252
        %v1256 = vmul.f32 %v1240, %v1253
        %v1257 = vmul.f32 %v1242, %v1254
        %v1258 = vpack.c.bf16 %v1256, %v1255
        %v1259 = vpack.c.bf16 %v1257, %v1257
        %1260 = vrot.lane.b32.xlu0 %v1081, 56
        %v1261 = vpop.permute.xlu0 %1260
        %1262 = vrot.lane.b32.xlu0 %v1082, 56
        %v1263 = vpop.permute.xlu0 %1262
        %v1266 = vsel %vm1118, %v1258, 0
        %v1269 = vsel %vm1118, %v1259, 0
        %v1272 = vsel %vm1165, %v1263, 0
        %1274 = vmatpush.bf16.msra.mxu0 0
        %1275 = vmatpush.bf16.msra.mxu0 0
        %1276 = vmatpush.bf16.msra.mxu0 0
        %1277 = vmatpush.bf16.msra.mxu0 0
        %1278 = vmatpush.bf16.msra.mxu0 0
        %1279 = vmatpush.bf16.msra.mxu0 0
        %1280 = vmatpush.bf16.msra.mxu0 %v1272
        %1281 = vmatpush.bf16.msra.mxu0 %v1261
        %1282 = vmatmul.bf16.gmra.mxu0 %v1266
        %v1283 = vpop.f32.mrf.mxu0
        %v1284 = vadd.f32 0.0, %v1283
        %v1285 = vpop.f32.mrf.mxu0
        %v1286 = vadd.f32 0.0, %v1285
        %1287 = vmatmul.bf16.gmra.mxu0 %v1269
        %v1288 = vpop.f32.mrf.mxu0
        %v1289 = vadd.f32 0.0, %v1288
        %v1290 = vpop.f32.mrf.mxu0
        %1291 = vdwg.mxu0
        %1292 = vrot.lane.b32.xlu0 %v1081, 112
        %v1293 = vpop.permute.xlu0 %1292
        %1294 = vrot.lane.b32.xlu0 %v1082, 112
        %v1295 = vpop.permute.xlu0 %1294
        %1296 = vrot.lane.b32.xlu0 %v1081, 80
        %v1297 = vpop.permute.xlu0 %1296
        %1298 = vrot.lane.b32.xlu0 %v1082, 80
        %v1299 = vpop.permute.xlu0 %1298
        %v1301 = vsel %vm1087, %v1293, 0
        %v1304 = vsel %vm1087, %v1295, 0
        %v1307 = vsel %vm1087, %v1297, 0
        %v1310 = vsel %vm1087, %v1299, 0
        %1312 = vmatpush.bf16.xpose.msra.mxu0 0
        %1313 = vmatpush.bf16.xpose.msra.mxu0 0
        %1314 = vmatpush.bf16.xpose.msra.mxu0 0
        %1315 = vmatpush.bf16.xpose.msra.mxu0 0
        %1316 = vmatpush.bf16.xpose.msra.mxu0 0
        %1317 = vmatpush.bf16.xpose.msra.mxu0 0
        %1318 = vmatpush.bf16.xpose.msra.mxu0 %v1310
        %1319 = vmatpush.bf16.xpose.msra.mxu0 %v1307
        %1320 = vmatmul.bf16.gmra.mxu0 %v1301
        %v1321 = vpop.f32.mrf.mxu0
        %v1322 = vadd.f32 %v1074, %v1321
        %v1323 = vpop.f32.mrf.mxu0
        %v1324 = vadd.f32 %v1074, %v1323
        %1325 = vmatmul.bf16.gmra.mxu0 %v1304
        %v1326 = vpop.f32.mrf.mxu0
        %v1327 = vadd.f32 %v1074, %v1326
        %v1328 = vpop.f32.mrf.mxu0
        %1329 = vdwg.mxu0
        %v1330 = vsel %vm1118, %v1322, -inf
        %1331 = vmax.xlane.f32.xlu0 %v1330
        %v1332 = vpop.xlane.xlu0 %1331
        %v1333 = vsel %vm1118, %v1324, -inf
        %1334 = vmax.xlane.f32.xlu0 %v1333
        %v1335 = vpop.xlane.xlu0 %1334
        %v1336 = vsel %vm1118, %v1327, -inf
        %1337 = vmax.xlane.f32.xlu0 %v1336
        %v1338 = vpop.xlane.xlu0 %1337
        %v1339 = vsub.f32 %v1322, %v1332
        %v1340 = vsub.f32 %v1324, %v1335
        %v1341 = vsub.f32 %v1327, %v1338
        %v1342 = vmul.f32 %v1339, 1.442695
        %v1343 = vpow.pop %v1342
        %v1344 = vmul.f32 %v1340, 1.442695
        %v1345 = vpow.pop %v1344
        %v1346 = vmul.f32 %v1341, 1.442695
        %v1347 = vpow.pop %v1346
        %v1348 = vsel %vm1118, %v1343, 0.0
        %1349 = vadd.xlane.f32.xlu0 %v1348
        %v1350 = vpop.xlane.xlu0 %1349
        %v1351 = vsel %vm1118, %v1345, 0.0
        %1352 = vadd.xlane.f32.xlu0 %v1351
        %v1353 = vpop.xlane.xlu0 %1352
        %v1354 = vsel %vm1118, %v1347, 0.0
        %1355 = vadd.xlane.f32.xlu0 %v1354
        %v1356 = vpop.xlane.xlu0 %1355
        %v1357 = vrcp.pop %v1350
        %v1358 = vrcp.pop %v1353
        %v1359 = vrcp.pop %v1356
        %v1360 = vmul.f32 %v1343, %v1357
        %v1361 = vmul.f32 %v1345, %v1358
        %v1362 = vmul.f32 %v1347, %v1359
        %v1363 = vpack.c.bf16 %v1361, %v1360
        %v1364 = vpack.c.bf16 %v1362, %v1362
        %1365 = vrot.lane.b32.xlu0 %v1081, 48
        %v1366 = vpop.permute.xlu0 %1365
        %1367 = vrot.lane.b32.xlu0 %v1082, 48
        %v1368 = vpop.permute.xlu0 %1367
        %v1371 = vsel %vm1118, %v1363, 0
        %v1374 = vsel %vm1118, %v1364, 0
        %v1377 = vsel %vm1165, %v1368, 0
        %1379 = vmatpush.bf16.msra.mxu0 0
        %1380 = vmatpush.bf16.msra.mxu0 0
        %1381 = vmatpush.bf16.msra.mxu0 0
        %1382 = vmatpush.bf16.msra.mxu0 0
        %1383 = vmatpush.bf16.msra.mxu0 0
        %1384 = vmatpush.bf16.msra.mxu0 0
        %1385 = vmatpush.bf16.msra.mxu0 %v1377
        %1386 = vmatpush.bf16.msra.mxu0 %v1366
        %1387 = vmatmul.bf16.gmra.mxu0 %v1371
        %v1388 = vpop.f32.mrf.mxu0
        %v1389 = vadd.f32 0.0, %v1388
        %v1390 = vpop.f32.mrf.mxu0
        %v1391 = vadd.f32 0.0, %v1390
        %1392 = vmatmul.bf16.gmra.mxu0 %v1374
        %v1393 = vpop.f32.mrf.mxu0
        %v1394 = vadd.f32 0.0, %v1393
        %v1395 = vpop.f32.mrf.mxu0
        %1396 = vdwg.mxu0
        %1397 = vrot.lane.b32.xlu0 %v1081, 104
        %v1398 = vpop.permute.xlu0 %1397
        %1399 = vrot.lane.b32.xlu0 %v1082, 104
        %v1400 = vpop.permute.xlu0 %1399
        %1401 = vrot.lane.b32.xlu0 %v1081, 72
        %v1402 = vpop.permute.xlu0 %1401
        %1403 = vrot.lane.b32.xlu0 %v1082, 72
        %v1404 = vpop.permute.xlu0 %1403
        %v1406 = vsel %vm1087, %v1398, 0
        %v1409 = vsel %vm1087, %v1400, 0
        %v1412 = vsel %vm1087, %v1402, 0
        %v1415 = vsel %vm1087, %v1404, 0
        %1417 = vmatpush.bf16.xpose.msra.mxu0 0
        %1418 = vmatpush.bf16.xpose.msra.mxu0 0
        %1419 = vmatpush.bf16.xpose.msra.mxu0 0
        %1420 = vmatpush.bf16.xpose.msra.mxu0 0
        %1421 = vmatpush.bf16.xpose.msra.mxu0 0
        %1422 = vmatpush.bf16.xpose.msra.mxu0 0
        %1423 = vmatpush.bf16.xpose.msra.mxu0 %v1415
        %1424 = vmatpush.bf16.xpose.msra.mxu0 %v1412
        %1425 = vmatmul.bf16.gmra.mxu0 %v1406
        %v1426 = vpop.f32.mrf.mxu0
        %v1427 = vadd.f32 %v1074, %v1426
        %v1428 = vpop.f32.mrf.mxu0
        %v1429 = vadd.f32 %v1074, %v1428
        %1430 = vmatmul.bf16.gmra.mxu0 %v1409
        %v1431 = vpop.f32.mrf.mxu0
        %v1432 = vadd.f32 %v1074, %v1431
        %v1433 = vpop.f32.mrf.mxu0
        %1434 = vdwg.mxu0
        %v1435 = vsel %vm1118, %v1427, -inf
        %1436 = vmax.xlane.f32.xlu0 %v1435
        %v1437 = vpop.xlane.xlu0 %1436
        %v1438 = vsel %vm1118, %v1429, -inf
        %1439 = vmax.xlane.f32.xlu0 %v1438
        %v1440 = vpop.xlane.xlu0 %1439
        %v1441 = vsel %vm1118, %v1432, -inf
        %1442 = vmax.xlane.f32.xlu0 %v1441
        %v1443 = vpop.xlane.xlu0 %1442
        %v1444 = vsub.f32 %v1427, %v1437
        %v1445 = vsub.f32 %v1429, %v1440
        %v1446 = vsub.f32 %v1432, %v1443
        %v1447 = vmul.f32 %v1444, 1.442695
        %v1448 = vpow.pop %v1447
        %v1449 = vmul.f32 %v1445, 1.442695
        %v1450 = vpow.pop %v1449
        %v1451 = vmul.f32 %v1446, 1.442695
        %v1452 = vpow.pop %v1451
        %v1453 = vsel %vm1118, %v1448, 0.0
        %1454 = vadd.xlane.f32.xlu0 %v1453
        %v1455 = vpop.xlane.xlu0 %1454
        %v1456 = vsel %vm1118, %v1450, 0.0
        %1457 = vadd.xlane.f32.xlu0 %v1456
        %v1458 = vpop.xlane.xlu0 %1457
        %v1459 = vsel %vm1118, %v1452, 0.0
        %1460 = vadd.xlane.f32.xlu0 %v1459
        %v1461 = vpop.xlane.xlu0 %1460
        %v1462 = vrcp.pop %v1455
        %v1463 = vrcp.pop %v1458
        %v1464 = vrcp.pop %v1461
        %v1465 = vmul.f32 %v1448, %v1462
        %v1466 = vmul.f32 %v1450, %v1463
        %v1467 = vmul.f32 %v1452, %v1464
        %v1468 = vpack.c.bf16 %v1466, %v1465
        %v1469 = vpack.c.bf16 %v1467, %v1467
        %1470 = vrot.lane.b32.xlu0 %v1081, 40
        %v1471 = vpop.permute.xlu0 %1470
        %1472 = vrot.lane.b32.xlu0 %v1082, 40
        %v1473 = vpop.permute.xlu0 %1472
        %v1476 = vsel %vm1118, %v1468, 0
        %v1479 = vsel %vm1118, %v1469, 0
        %v1482 = vsel %vm1165, %v1473, 0
        %1484 = vmatpush.bf16.msra.mxu0 0
        %1485 = vmatpush.bf16.msra.mxu0 0
        %1486 = vmatpush.bf16.msra.mxu0 0
        %1487 = vmatpush.bf16.msra.mxu0 0
        %1488 = vmatpush.bf16.msra.mxu0 0
        %1489 = vmatpush.bf16.msra.mxu0 0
        %1490 = vmatpush.bf16.msra.mxu0 %v1482
        %1491 = vmatpush.bf16.msra.mxu0 %v1471
        %1492 = vmatmul.bf16.gmra.mxu0 %v1476
        %v1493 = vpop.f32.mrf.mxu0
        %v1494 = vadd.f32 0.0, %v1493
        %v1495 = vpop.f32.mrf.mxu0
        %v1496 = vadd.f32 0.0, %v1495
        %1497 = vmatmul.bf16.gmra.mxu0 %v1479
        %v1498 = vpop.f32.mrf.mxu0
        %v1499 = vadd.f32 0.0, %v1498
        %v1500 = vpop.f32.mrf.mxu0
        %1501 = vdwg.mxu0
        %1505 = vrot.lane.b32.xlu0 %v1284, 8
        %v1506 = vpop.permute.xlu0 %1505
        %1507 = vrot.lane.b32.xlu0 %v1286, 8
        %v1508 = vpop.permute.xlu0 %1507
        %1509 = vrot.lane.b32.xlu0 %v1289, 8
        %v1510 = vpop.permute.xlu0 %1509
        %1517 = vrot.lane.b32.xlu0 %v1389, 16
        %v1518 = vpop.permute.xlu0 %1517
        %1519 = vrot.lane.b32.xlu0 %v1391, 16
        %v1520 = vpop.permute.xlu0 %1519
        %1521 = vrot.lane.b32.xlu0 %v1394, 16
        %v1522 = vpop.permute.xlu0 %1521
        %1529 = vrot.lane.b32.xlu0 %v1494, 24
        %v1530 = vpop.permute.xlu0 %1529
        %1531 = vrot.lane.b32.xlu0 %v1496, 24
        %v1532 = vpop.permute.xlu0 %1531
        %1533 = vrot.lane.b32.xlu0 %v1499, 24
        %v1534 = vpop.permute.xlu0 %1533
        %v1538 = vsel %vm1087, %v1179, %v1506
        %v1539 = vsel %vm1087, %v1181, %v1508
        %v1540 = vsel %vm1087, %v1184, %v1510
        %vm1541 = vcmask 130048
        %v1542 = vsel %vm1541, %v1538, %v1518
        %v1543 = vsel %vm1541, %v1539, %v1520
        %v1544 = vsel %vm1541, %v1540, %v1522
        %v1545 = vsel %vm1118, %v1542, %v1530
        %v1546 = vsel %vm1118, %v1543, %v1532
        %v1547 = vsel %vm1118, %v1544, %v1534
        %v1548 = vpack.c.bf16 %v1546, %v1545
        %v1549 = vpack.c.bf16 %v1547, %v1547
        %v1550 = vld [vmem:[%s752] sm:$0xf]
        %v1551 = vld [vmem:[%s752 + $0x4] sm:$0xf]
        %v1552 = vld [vmem:[%s752 + $0x8] sm:$0xf]
        %v1553 = vld [vmem:[%s752 + $0xc] sm:$0xf]
        %v1554 = vld [vmem:[%s755] sm:$0x1]
        %v1556 = vperm.slane %v1554, 0
        %v1562 = vunpack.c.l.b16 %v1550
        %v1563 = vunpack.c.l.b16 %v1551
        %v1564 = vunpack.c.l.b16 %v1552
        %v1565 = vunpack.c.l.b16 %v1553
        %v1566 = vpack.c.b16 %v1563, %v1562
        %v1567 = vpack.c.b16 %v1565, %v1564
        %v1571 = vsel %vm936, %v1548, 0
        %v1574 = vsel %vm936, %v1549, 0
        %1576 = vmatpush.bf16.msra.mxu0 0
        %1577 = vmatpush.bf16.msra.mxu0 0
        %1578 = vmatpush.bf16.msra.mxu0 0
        %1579 = vmatpush.bf16.msra.mxu0 0
        %1580 = vmatpush.bf16.msra.mxu0 0
        %1581 = vmatpush.bf16.msra.mxu0 0
        %1582 = vmatpush.bf16.msra.mxu0 %v1567
        %1583 = vmatpush.bf16.msra.mxu0 %v1566
        %1584 = vmatmul.bf16.gmra.mxu0 %v1571
        %v1585 = vpop.f32.mrf.mxu0
        %v1586 = vadd.f32 %v1556, %v1585
        %v1587 = vpop.f32.mrf.mxu0
        %v1588 = vadd.f32 %v1556, %v1587
        %1589 = vmatmul.bf16.gmra.mxu0 %v1574
        %v1590 = vpop.f32.mrf.mxu0
        %v1591 = vadd.f32 %v1556, %v1590
        %v1592 = vpop.f32.mrf.mxu0
        %1593 = vdwg.mxu0
        %v1594 = vadd.f32 %v931, %v1586
        %v1595 = vadd.f32 %v932, %v1588
        %v1596 = vadd.f32 %v933, %v1591
        %v1597 = vld [vmem:[%s758] sm:$0x1]
        %v1598 = vld [vmem:[%s761] sm:$0x1]
        %v1599 = vsel %vm936, %v1594, 0.0
        %1600 = vadd.xlane.f32.xlu0 %v1599
        %v1601 = vpop.xlane.xlu0 %1600
        %v1602 = vsel %vm936, %v1595, 0.0
        %1603 = vadd.xlane.f32.xlu0 %v1602
        %v1604 = vpop.xlane.xlu0 %1603
        %v1605 = vsel %vm936, %v1596, 0.0
        %1606 = vadd.xlane.f32.xlu0 %v1605
        %v1607 = vpop.xlane.xlu0 %1606
        %v1608 = vmul.f32 %v1601, %v952
        %v1609 = vmul.f32 %v1604, %v952
        %v1610 = vmul.f32 %v1607, %v952
        %v1611 = vsub.f32 %v1594, %v1608
        %v1612 = vsub.f32 %v1595, %v1609
        %v1613 = vsub.f32 %v1596, %v1610
        %v1614 = vmul.f32 %v1611, %v1611
        %v1615 = vmul.f32 %v1612, %v1612
        %v1616 = vmul.f32 %v1613, %v1613
        %v1617 = vsel %vm936, %v1614, 0.0
        %1618 = vadd.xlane.f32.xlu0 %v1617
        %v1619 = vpop.xlane.xlu0 %1618
        %v1620 = vsel %vm936, %v1615, 0.0
        %1621 = vadd.xlane.f32.xlu0 %v1620
        %v1622 = vpop.xlane.xlu0 %1621
        %v1623 = vsel %vm936, %v1616, 0.0
        %1624 = vadd.xlane.f32.xlu0 %v1623
        %v1625 = vpop.xlane.xlu0 %1624
        %v1626 = vmul.f32 %v1619, %v952
        %v1627 = vmul.f32 %v1622, %v952
        %v1628 = vmul.f32 %v1625, %v952
        %v1629 = vadd.f32 %v1626, 1e-05
        %v1630 = vadd.f32 %v1627, 1e-05
        %v1631 = vadd.f32 %v1628, 1e-05
        %v1632 = vrsqrt.pop %v1629
        %v1633 = vmul.f32 %v1632, %v1629
        %v1634 = vmul.f32 %v1633, %v1632
        %v1635 = vmul.f32 0.5, %v1634
        %v1636 = vsub.f32 1.5, %v1635
        %v1637 = vmul.f32 %v1632, %v1636
        %vm1638 = vweird.f32 %v1629
        %vm1639 = vweird.f32 %v1632
        %vm1640 = vmor %vm1638, %vm1639
        %v1641 = vsel %vm1640, %v1632, %v1637
        %v1642 = vrsqrt.pop %v1630
        %v1643 = vmul.f32 %v1642, %v1630
        %v1644 = vmul.f32 %v1643, %v1642
        %v1645 = vmul.f32 0.5, %v1644
        %v1646 = vsub.f32 1.5, %v1645
        %v1647 = vmul.f32 %v1642, %v1646
        %vm1648 = vweird.f32 %v1630
        %vm1649 = vweird.f32 %v1642
        %vm1650 = vmor %vm1648, %vm1649
        %v1651 = vsel %vm1650, %v1642, %v1647
        %v1652 = vrsqrt.pop %v1631
        %v1653 = vmul.f32 %v1652, %v1631
        %v1654 = vmul.f32 %v1653, %v1652
        %v1655 = vmul.f32 0.5, %v1654
        %v1656 = vsub.f32 1.5, %v1655
        %v1657 = vmul.f32 %v1652, %v1656
        %vm1658 = vweird.f32 %v1631
        %vm1659 = vweird.f32 %v1652
        %vm1660 = vmor %vm1658, %vm1659
        %v1661 = vsel %vm1660, %v1652, %v1657
        %v1662 = vmul.f32 %v1611, %v1641
        %v1663 = vmul.f32 %v1612, %v1651
        %v1664 = vmul.f32 %v1613, %v1661
        %v1666 = vperm.slane %v1597, 0
        %v1668 = vmul.f32 %v1662, %v1666
        %v1669 = vmul.f32 %v1663, %v1666
        %v1670 = vmul.f32 %v1664, %v1666
        %v1672 = vperm.slane %v1598, 0
        %v1674 = vadd.f32 %v1668, %v1672
        %v1675 = vadd.f32 %v1669, %v1672
        %v1676 = vadd.f32 %v1670, %v1672
        %v1677 = vpack.c.bf16 %v1675, %v1674
        %v1678 = vpack.c.bf16 %v1676, %v1676
        %v1679 = vld [vmem:[%s766] sm:$0xf]
        %v1680 = vld [vmem:[%s766 + $0x4] sm:$0xf]
        %v1681 = vld [vmem:[%s766 + $0x8] sm:$0xf]
        %v1682 = vld [vmem:[%s766 + $0xc] sm:$0xf]
        %v1683 = vld [vmem:[%s769] sm:$0x1]
        %v1685 = vperm.slane %v1683, 0
        %v1691 = vunpack.c.l.b16 %v1679
        %v1692 = vunpack.c.l.b16 %v1680
        %v1693 = vunpack.c.l.b16 %v1681
        %v1694 = vunpack.c.l.b16 %v1682
        %v1695 = vpack.c.b16 %v1692, %v1691
        %v1696 = vpack.c.b16 %v1694, %v1693
        %v1700 = vsel %vm936, %v1677, 0
        %v1703 = vsel %vm936, %v1678, 0
        %1705 = vmatpush.bf16.msra.mxu0 0
        %1706 = vmatpush.bf16.msra.mxu0 0
        %1707 = vmatpush.bf16.msra.mxu0 0
        %1708 = vmatpush.bf16.msra.mxu0 0
        %1709 = vmatpush.bf16.msra.mxu0 0
        %1710 = vmatpush.bf16.msra.mxu0 0
        %1711 = vmatpush.bf16.msra.mxu0 %v1696
        %1712 = vmatpush.bf16.msra.mxu0 %v1695
        %1713 = vmatmul.bf16.gmra.mxu0 %v1700
        %v1714 = vpop.f32.mrf.mxu0
        %v1715 = vadd.f32 %v1685, %v1714
        %v1716 = vpop.f32.mrf.mxu0
        %v1717 = vadd.f32 %v1685, %v1716
        %1718 = vmatmul.bf16.gmra.mxu0 %v1703
        %v1719 = vpop.f32.mrf.mxu0
        %v1720 = vadd.f32 %v1685, %v1719
        %v1721 = vpop.f32.mrf.mxu0
        %1722 = vdwg.mxu0
        %v1723 = vmul.f32 %v1715, 1.702
        %v1724 = vmul.f32 %v1717, 1.702
        %v1725 = vmul.f32 %v1720, 1.702
        %v1726 = vxor.u32 %v1723, 2147483648
        %v1727 = vxor.u32 %v1724, 2147483648
        %v1728 = vxor.u32 %v1725, 2147483648
        %v1729 = vmul.f32 %v1726, 1.442695
        %v1730 = vpow.pop %v1729
        %v1731 = vmul.f32 %v1727, 1.442695
        %v1732 = vpow.pop %v1731
        %v1733 = vmul.f32 %v1728, 1.442695
        %v1734 = vpow.pop %v1733
        %v1735 = vadd.f32 %v1730, 1.0
        %v1736 = vadd.f32 %v1732, 1.0
        %v1737 = vadd.f32 %v1734, 1.0
        %v1738 = vrcp.pop %v1735
        %v1739 = vmul.f32 %v1735, %v1738
        %v1740 = vsub.f32 1.0, %v1739
        %v1741 = vmul.f32 %v1738, %v1740
        %v1742 = vadd.f32 %v1738, %v1741
        %vm1743 = vweird.f32 %v1735
        %vm1744 = vweird.f32 %v1738
        %vm1745 = vmor %vm1743, %vm1744
        %v1746 = vsel %vm1745, %v1738, %v1742
        %v1747 = vand.u32 2147483647, %v1735
        %vm1748 = vcmp.eq.f32.partialorder %v1747, 8.507059e+37
        %v1749 = vand.u32 %v1735, 2147483648
        %v1750 = vor.u32 1.1754944e-38, %v1749
        %v1751 = vsel %vm1748, %v1750, %v1746
        %v1752 = vmul.f32 1.0, %v1751
        %v1753 = vrcp.pop %v1736
        %v1754 = vmul.f32 %v1736, %v1753
        %v1755 = vsub.f32 1.0, %v1754
        %v1756 = vmul.f32 %v1753, %v1755
        %v1757 = vadd.f32 %v1753, %v1756
        %vm1758 = vweird.f32 %v1736
        %vm1759 = vweird.f32 %v1753
        %vm1760 = vmor %vm1758, %vm1759
        %v1761 = vsel %vm1760, %v1753, %v1757
        %v1762 = vand.u32 2147483647, %v1736
        %vm1763 = vcmp.eq.f32.partialorder %v1762, 8.507059e+37
        %v1764 = vand.u32 %v1736, 2147483648
        %v1765 = vor.u32 1.1754944e-38, %v1764
        %v1766 = vsel %vm1763, %v1765, %v1761
        %v1767 = vmul.f32 1.0, %v1766
        %v1768 = vrcp.pop %v1737
        %v1769 = vmul.f32 %v1737, %v1768
        %v1770 = vsub.f32 1.0, %v1769
        %v1771 = vmul.f32 %v1768, %v1770
        %v1772 = vadd.f32 %v1768, %v1771
        %vm1773 = vweird.f32 %v1737
        %vm1774 = vweird.f32 %v1768
        %vm1775 = vmor %vm1773, %vm1774
        %v1776 = vsel %vm1775, %v1768, %v1772
        %v1777 = vand.u32 2147483647, %v1737
        %vm1778 = vcmp.eq.f32.partialorder %v1777, 8.507059e+37
        %v1779 = vand.u32 %v1737, 2147483648
        %v1780 = vor.u32 1.1754944e-38, %v1779
        %v1781 = vsel %vm1778, %v1780, %v1776
        %v1782 = vmul.f32 1.0, %v1781
        %v1783 = vmul.f32 %v1715, %v1752
        %v1784 = vmul.f32 %v1717, %v1767
        %v1785 = vmul.f32 %v1720, %v1782
        %v1786 = vpack.c.bf16 %v1784, %v1783
        %v1787 = vpack.c.bf16 %v1785, %v1785
        %v1788 = vld [vmem:[%s774] sm:$0xf]
        %v1789 = vld [vmem:[%s774 + $0x4] sm:$0xf]
        %v1790 = vld [vmem:[%s774 + $0x8] sm:$0xf]
        %v1791 = vld [vmem:[%s774 + $0xc] sm:$0xf]
        %v1792 = vld [vmem:[%s774 + $0x10] sm:$0xf]
        %v1793 = vld [vmem:[%s774 + $0x14] sm:$0xf]
        %v1794 = vld [vmem:[%s774 + $0x18] sm:$0xf]
        %v1795 = vld [vmem:[%s774 + $0x1c] sm:$0xf]
        %v1796 = vld [vmem:[%s777] sm:$0x1]
        %v1798 = vperm.slane %v1796, 0
        %v1808 = vunpack.c.l.b16 %v1788
        %v1809 = vunpack.c.l.b16 %v1789
        %v1810 = vunpack.c.l.b16 %v1790
        %v1811 = vunpack.c.l.b16 %v1791
        %v1812 = vunpack.c.l.b16 %v1792
        %v1813 = vunpack.c.l.b16 %v1793
        %v1814 = vunpack.c.l.b16 %v1794
        %v1815 = vunpack.c.l.b16 %v1795
        %v1816 = vpack.c.b16 %v1809, %v1808
        %v1817 = vpack.c.b16 %v1811, %v1810
        %v1818 = vpack.c.b16 %v1813, %v1812
        %v1819 = vpack.c.b16 %v1815, %v1814
        %vm1824 = vcmask 523264
        %v1826 = vsel %vm1824, %v1786, 0
        %v1829 = vsel %vm1824, %v1787, 0
        %1831 = vmatpush.bf16.msra.mxu0 0
        %1832 = vmatpush.bf16.msra.mxu0 0
        %1833 = vmatpush.bf16.msra.mxu0 0
        %1834 = vmatpush.bf16.msra.mxu0 0
        %1835 = vmatpush.bf16.msra.mxu0 %v1819
        %1836 = vmatpush.bf16.msra.mxu0 %v1818
        %1837 = vmatpush.bf16.msra.mxu0 %v1817
        %1838 = vmatpush.bf16.msra.mxu0 %v1816
        %1839 = vmatmul.bf16.gmra.mxu0 %v1826
        %v1840 = vpop.f32.mrf.mxu0
        %v1841 = vadd.f32 %v1798, %v1840
        %v1842 = vpop.f32.mrf.mxu0
        %v1843 = vadd.f32 %v1798, %v1842
        %1844 = vmatmul.bf16.gmra.mxu0 %v1829
        %v1845 = vpop.f32.mrf.mxu0
        %v1846 = vadd.f32 %v1798, %v1845
        %v1847 = vpop.f32.mrf.mxu0
        %1848 = vdwg.mxu0
        %v1849 = vadd.f32 %v1594, %v1841
        %v1850 = vadd.f32 %v1595, %v1843
        %v1851 = vadd.f32 %v1596, %v1846
        %1852 = vst.msk [vmem:[#allocation2] sm:$0xff] %vm936, %v1849
        %1853 = vst.msk [vmem:[#allocation2 + $0x8] sm:$0xff] %vm936, %v1850
        %1854 = vst.msk [vmem:[#allocation2 + $0x10] sm:$0xff] %vm936, %v1851
        %p1855 = scmp.eq.s32.totalorder %s37, 1
        // Predicated region
        $region97: #{clip_vision_tower_forward.1} parent=91 // pred_check
          %p1856 = pneg %p1855
        $region98: #{clip_vision_tower_forward.1} parent=91 // pred_check_branch
          %1858 = sbr.rel (%p1856) target = $region100
        $region99: #{clip_vision_tower_forward.1} parent=91 // pred_region
          %1859 = vst.msk [vmem:[%s728] sm:$0xff] %vm936, %v1849
          %1860 = vst.msk [vmem:[%s728 + $0x8] sm:$0xff] %vm936, %v1850
        $region100: #{clip_vision_tower_forward.1} parent=91 // pred_fallthru
          _
        %s1861 = sand.u32 %s495, 1
        %s1862 = scalar_lea.sflag [#allocation4], %s1861
        %s1863 = sand.u32 %s495, 1
        %s1864 = smul.addr %s1863, 16
        %s1865 = scalar_lea.vmem [#allocation3], %s1864
        // Predicated region
        $region101: #{clip_vision_tower_forward.1} parent=91 // pred_check
          %p1866 = pneg %p505
        $region102: #{clip_vision_tower_forward.1} parent=91 // pred_check_branch
          %1868 = sbr.rel (%p1866) target = $region104
        $region103: #{clip_vision_tower_forward.1} parent=91 // pred_region
          %1870 = vsyncadd %s1862, 0
          %s1871 = smul.addr %s36, 2
          %s1872 = smul.addr %s1871, 8
          %s1873 = scalar_lea.hbm %s18, %s1872
          %s1874 = sshll.u32 %s1865, 4
          %s1875 = int_to_ptr.vmem [resolvable:$true] %s1874
          %s1876 = sshll.u32 %s1873, 4
          %s1877 = int_to_ptr.hbm [resolvable:$true] %s1876
          %1882 = dma.vmem_to_hbm [thread:$0]  %s1875, 256, %s1877, %s1862, 128, 128, 8
        $region104: #{clip_vision_tower_forward.1} parent=91 // pred_fallthru
          _
      $region92: #{clip_vision_tower_forward.1} parent=5 // pred_fallthru
        _
      %p1883 = scmp.le.s32.totalorder 2, %s27
      // Predicated region
      $region105: #{clip_vision_tower_forward.1} parent=5 // pred_check
        %p1884 = pneg %p1883
      $region106: #{clip_vision_tower_forward.1} parent=5 // pred_check_branch
        %1886 = sbr.rel (%p1884) target = $region108
      $region107: #{clip_vision_tower_forward.1} parent=5 // pred_region
        %s1887 = ssub.s32 %s27, 2
        // Predicated region
        $region109: #{clip_vision_tower_forward.1} parent=107 // pred_check
          %p1888 = pneg %p511
        $region110: #{clip_vision_tower_forward.1} parent=107 // pred_check_branch
          %1890 = sbr.rel (%p1888) target = $region112
        $region111: #{clip_vision_tower_forward.1} parent=107 // pred_region
          %s1891 = sand.u32 %s496, 1
          %s1892 = scalar_lea.sflag [#allocation4], %s1891
          %s1893 = sand.u32 %s496, 1
          %s1894 = smul.addr %s1893, 16
          %s1895 = scalar_lea.vmem [#allocation3], %s1894
          %1897 = dma.done %s1892, 256
        $region112: #{clip_vision_tower_forward.1} parent=107 // pred_fallthru
          _
      $region108: #{clip_vision_tower_forward.1} parent=5 // pred_fallthru
        _
    $region6: #{clip_vision_tower_forward.1} parent=1 // loop_footer
      %s31 = sadd.s32 1, %s27
    $region7: #{clip_vision_tower_forward.1} parent=1 // loop_footer_branch
      %26 = sbr.rel target = $region3
    $region8: #{clip_vision_tower_forward.1} parent=1 // loop_exit
      _
    %1898 = vsyncpa [#allocation4], 1
    %s1899 = scalar_lea.sflag [#allocation4], 1
    %1900 = vsyncpa %s1899, 1

</llo_original>
